<compile_context>
chip_gen: v6e
topology: v6e:2x2x1
jax: 0.10.0
libtpu: 0.0.40
codegen_flags: <defaults>
</compile_context>

<pallas_src>
import functools

import jax
import jax.numpy as jnp
from jax import lax
from jax.experimental import pallas as pl
from jax.experimental.pallas import tpu as pltpu

# Max-pool out-of-bounds fill.  Every 3x3/s1/p1 window contains its (valid)
# center element, so this value never survives the max and never reaches the
# branch-4 matmul (avoids the +/-inf fragility of the old padded layout).
_NEG_FILL = float(jnp.finfo(jnp.float32).min)


def _round_up(x, m):
    return (x + m - 1) // m * m


# ------------------------------ fused kernel ------------------------------- #

def _inception_kernel(xf_ref, w1_ref, b1_ref, w2_ref, b2_ref, w3_ref, b3_ref,
                      w4_ref, b4_ref, o_ref, *,
                      H, W, c1, c2, c3, c4, c2r_pad, c3r_pad, k2, k3):
    """Whole Inception block for one batch image; all intermediates stay in VMEM.

    xf_ref : (1, Cin, H*W)              lane-dense flat NCHW input
    w1_ref : (c1+c2r_pad+c3r_pad, Cin)  fused 1x1 weights [b1 | b2red(pad) | b3red(pad)]
    w2_ref : (c2, k2*k2*c2r_pad)        3x3 weights, columns ordered (kh, kw, cin_pad)
    w3_ref : (c3, k3*k3*c3r_pad)        5x5 weights, columns ordered (kh, kw, cin_pad)
    w4_ref : (c4, Cin)                  pool-proj 1x1 weights
    o_ref  : (1, c1+c2+c3+c4, H*W)      channel-concatenated output
    """
    hw = H * W
    x = xf_ref[0]                                               # (Cin, HW)

    # Lane-index helpers for the roll+mask shifted taps.  Row bounds reduce to
    # plain comparisons on the flat index; column index uses a cheap bitwise
    # AND when W is a power of two (true here).
    idx = lax.broadcasted_iota(jnp.int32, (1, hw), 1)
    if W & (W - 1) == 0:
        col = jnp.bitwise_and(idx, W - 1)
    else:
        col = lax.rem(idx, W)          # not exercised at these shapes
    mask_cache = {}

    def valid_mask(dh, dw):
        """(1, HW) bool: output pixels whose (dh, dw)-shifted source is in-bounds."""
        if (dh, dw) in mask_cache:
            return mask_cache[(dh, dw)]
        conds = []
        if dh < 0:
            conds.append(idx >= (-dh) * W)          # row >= -dh
        elif dh > 0:
            conds.append(idx < (H - dh) * W)        # row <  H - dh
        if dw < 0:
            conds.append(col >= -dw)
        elif dw > 0:
            conds.append(col < W - dw)
        m = None
        for cnd in conds:
            m = cnd if m is None else jnp.logical_and(m, cnd)
        mask_cache[(dh, dw)] = m
        return m

    def shifted_tap(t, dh, dw, fill):
        """tap[:, p] = t[:, p + dh*W + dw]; out-of-bounds positions -> fill.

        pltpu.roll follows jnp.roll semantics (out[i] = x[(i - shift) % n]), so
        reading x[i + off] needs shift = (-off) % n.  Wrapped values are always
        covered by the validity mask.
        """
        off = dh * W + dw
        shifted = t if off == 0 else pltpu.roll(t, (-off) % hw, axis=1)
        m = valid_mask(dh, dw)
        return shifted if m is None else jnp.where(m, shifted, fill)

    # ---- stage 1: the three 1x1 convs that read x, fused into ONE matmul.
    y1 = jnp.dot(w1_ref[...], x, preferred_element_type=jnp.float32) + b1_ref[...]
    y1 = jnp.maximum(y1, 0.0)
    o_ref[0, 0:c1, :] = y1[0:c1].astype(o_ref.dtype)            # branch 1
    t2 = y1[c1:c1 + c2r_pad]                                    # pad rows are exactly 0
    t3 = y1[c1 + c2r_pad:c1 + c2r_pad + c3r_pad]

    # ---- branch 2 / 3: KxK conv (stride 1, 'same') as ONE deep-contraction matmul.
    def conv_branch(t, w_ref, b_ref, k, c_lo, c_hi):
        p = (k - 1) // 2
        taps = []
        for kh in range(k):
            for kw in range(k):
                taps.append(shifted_tap(t, kh - p, kw - p, 0.0))
        patches = jnp.concatenate(taps, axis=0)                 # (k*k*cin_pad, HW)
        y = jnp.dot(w_ref[...], patches,
                    preferred_element_type=jnp.float32) + b_ref[...]
        o_ref[0, c_lo:c_hi, :] = jnp.maximum(y, 0.0).astype(o_ref.dtype)

    conv_branch(t2, w2_ref, b2_ref, k2, c1, c1 + c2)            # branch 2 (3x3)
    conv_branch(t3, w3_ref, b3_ref, k3, c1 + c2, c1 + c2 + c3)  # branch 3 (5x5)

    # ---- branch 4: 3x3/s1/p1 max-pool (roll+mask) fused with its 1x1 projection.
    pooled = x                                                  # center tap, always valid
    for kh in range(3):
        for kw in range(3):
            if kh == 1 and kw == 1:
                continue
            pooled = jnp.maximum(pooled, shifted_tap(x, kh - 1, kw - 1, _NEG_FILL))
    y4 = jnp.dot(w4_ref[...], pooled, preferred_element_type=jnp.float32) + b4_ref[...]
    o_ref[0, c1 + c2 + c3:c1 + c2 + c3 + c4, :] = (
        jnp.maximum(y4, 0.0).astype(o_ref.dtype))


# ------------------------------ JAX wrapper -------------------------------- #

def _w1x1_mat(w_hwio):
    """(1, 1, Cin, Cout) -> (Cout, Cin)."""
    return jnp.transpose(w_hwio[0, 0], (1, 0))


def _wkxk_mat(w_hwio, cin_pad):
    """(K, K, Cin, Cout) -> (Cout, K*K*cin_pad), columns ordered (kh, kw, cin_pad)."""
    k, _, cin, cout = w_hwio.shape
    wpad = jnp.pad(w_hwio, ((0, 0), (0, 0), (0, cin_pad - cin), (0, 0)))
    return jnp.transpose(wpad, (3, 0, 1, 2)).reshape(cout, k * k * cin_pad)


@jax.jit
def inception_forward(x_nchw, params):
    n, cin, h, w = x_nchw.shape
    hw = h * w
    c1 = params["b1_b"].shape[0]
    c2r, c2 = params["b2a_b"].shape[0], params["b2b_b"].shape[0]
    c3r, c3 = params["b3a_b"].shape[0], params["b3b_b"].shape[0]
    c4 = params["b4_b"].shape[0]
    k2 = params["b2b_w"].shape[0]
    k3 = params["b3b_w"].shape[0]
    c2r_pad = _round_up(c2r, 8)        # sublane-align the patch-matrix taps
    c3r_pad = _round_up(c3r, 8)
    ctot = c1 + c2 + c3 + c4

    xf = x_nchw.reshape(n, cin, hw)    # metadata-only reshape, no HBM copy

    # Fused stage-1 weights, row layout [branch1 | b2-reduce(pad) | b3-reduce(pad)].
    # Padded rows have zero weight and zero bias, so they leave the ReLU as exact
    # zeros and the matching (zero) columns of w2/w3 make them inert.
    def pad_rows(m, rows):
        return jnp.pad(m, ((0, rows - m.shape[0]), (0, 0)))

    w1cat = jnp.concatenate([
        _w1x1_mat(params["b1_w"]),
        pad_rows(_w1x1_mat(params["b2a_w"]), c2r_pad),
        pad_rows(_w1x1_mat(params["b3a_w"]), c3r_pad)], axis=0)
    b1cat = jnp.concatenate([
        params["b1_b"],
        jnp.pad(params["b2a_b"], (0, c2r_pad - c2r)),
        jnp.pad(params["b3a_b"], (0, c3r_pad - c3r))]).reshape(-1, 1)
    c1cat = c1 + c2r_pad + c3r_pad

    w2mat = _wkxk_mat(params["b2b_w"], c2r_pad)
    w3mat = _wkxk_mat(params["b3b_w"], c3r_pad)
    w4mat = _w1x1_mat(params["b4_w"])
    b2col = params["b2b_b"].reshape(c2, 1)
    b3col = params["b3b_b"].reshape(c3, 1)
    b4col = params["b4_b"].reshape(c4, 1)

    kernel = functools.partial(
        _inception_kernel, H=h, W=w, c1=c1, c2=c2, c3=c3, c4=c4,
        c2r_pad=c2r_pad, c3r_pad=c3r_pad, k2=k2, k3=k3)

    # grid=(N,): one image per step, >= 2 parallel steps so v7x megacore splits
    # the batch.  For larger N, block several images per step (bigger lane
    # slabs) to amortize the fixed per-step overhead.
    out_flat = pl.pallas_call(
        kernel,
        out_shape=jax.ShapeDtypeStruct((n, ctot, hw), x_nchw.dtype),
        grid_spec=pltpu.PrefetchScalarGridSpec(
            num_scalar_prefetch=0,
            grid=(n,),
            in_specs=[
                pl.BlockSpec((1, cin, hw), lambda i: (i, 0, 0)),
                pl.BlockSpec((c1cat, cin), lambda i: (0, 0)),
                pl.BlockSpec((c1cat, 1), lambda i: (0, 0)),
                pl.BlockSpec((c2, k2 * k2 * c2r_pad), lambda i: (0, 0)),
                pl.BlockSpec((c2, 1), lambda i: (0, 0)),
                pl.BlockSpec((c3, k3 * k3 * c3r_pad), lambda i: (0, 0)),
                pl.BlockSpec((c3, 1), lambda i: (0, 0)),
                pl.BlockSpec((c4, cin), lambda i: (0, 0)),
                pl.BlockSpec((c4, 1), lambda i: (0, 0)),
            ],
            out_specs=pl.BlockSpec((1, ctot, hw), lambda i: (i, 0, 0)),
        ),
        compiler_params=pltpu.CompilerParams(
            dimension_semantics=("parallel",)),
    )(xf, w1cat, b1cat, w2mat, b2col, w3mat, b3col, w4mat, b4col)

    return out_flat.reshape(n, ctot, h, w)


# --------------------------- parameter helpers ------------------------------ #

def init_inception_params(key, in_channels, ch1x1, ch3x3red, ch3x3,
                          ch5x5red, ch5x5, pool_proj):
    """Deterministic synthetic params. Conv weights stored as (K, K, Cin, Cout)."""
    def conv_params(k, kh, cin, cout):
        kw_, kb_ = jax.random.split(k)
        scale = 1.0 / jnp.sqrt(kh * kh * cin)
        wgt = jax.random.normal(kw_, (kh, kh, cin, cout), jnp.float32) * scale
        bias = jax.random.normal(kb_, (cout,), jnp.float32) * scale
        return wgt, bias

    keys = jax.random.split(key, 6)
    p = {}
    p["b1_w"], p["b1_b"] = conv_params(keys[0], 1, in_channels, ch1x1)
    p["b2a_w"], p["b2a_b"] = conv_params(keys[1], 1, in_channels, ch3x3red)
    p["b2b_w"], p["b2b_b"] = conv_params(keys[2], 3, ch3x3red, ch3x3)
    p["b3a_w"], p["b3a_b"] = conv_params(keys[3], 1, in_channels, ch5x5red)
    p["b3b_w"], p["b3b_b"] = conv_params(keys[4], 5, ch5x5red, ch5x5)
    p["b4_w"], p["b4_b"] = conv_params(keys[5], 1, in_channels, pool_proj)
    return p


# ----------------------- pure-JAX reference (check) ------------------------ #

def _conv_relu_ref(x, w, b, pad):
    y = lax.conv_general_dilated(
        x, w, window_strides=(1, 1), padding=[(pad, pad), (pad, pad)],
        dimension_numbers=("NHWC", "HWIO", "NHWC"),
        precision=lax.Precision.HIGHEST)
    return jnp.maximum(y + b, 0.0)


def inception_ref(x_nchw, p):
    x = jnp.transpose(x_nchw, (0, 2, 3, 1))
    b1 = _conv_relu_ref(x, p["b1_w"], p["b1_b"], 0)
    b2 = _conv_relu_ref(_conv_relu_ref(x, p["b2a_w"], p["b2a_b"], 0),
                        p["b2b_w"], p["b2b_b"], 1)
    b3 = _conv_relu_ref(_conv_relu_ref(x, p["b3a_w"], p["b3a_b"], 0),
                        p["b3b_w"], p["b3b_b"], 2)
    pooled = lax.reduce_window(x, -jnp.inf, lax.max, (1, 3, 3, 1),
                               (1, 1, 1, 1), ((0, 0), (1, 1), (1, 1), (0, 0)))
    b4 = _conv_relu_ref(pooled, p["b4_w"], p["b4_b"], 0)
    out = jnp.concatenate([b1, b2, b3, b4], axis=-1)
    return jnp.transpose(out, (0, 3, 1, 2))


# --------------------------------- main ------------------------------------ #

if __name__ == "__main__":
    key = jax.random.PRNGKey(0)
    k_x, k_p = jax.random.split(key)

    # Small shapes: N=2, Cin=4, H=W=16; Inception(4, 8, 4, 8, 4, 8, 8) -> 32 out ch.
    N, CIN, H, W = 2, 4, 16, 16
    x = jax.random.normal(k_x, (N, CIN, H, W), jnp.float32)
    params = init_inception_params(k_p, CIN, 8, 4, 8, 4, 8, 8)

    out = jax.block_until_ready(inception_forward(x, params))
    ref = jax.block_until_ready(inception_ref(x, params))

    assert out.shape == (N, 8 + 8 + 8 + 8, H, W), out.shape
    assert jnp.allclose(out, ref, rtol=1e-4, atol=1e-4), float(
        jnp.max(jnp.abs(out - ref)))

    print("KERNEL_OK")
</pallas_src>

<mosaic_0001>
module attributes {stable_mosaic.version = 11 : i64} {
  func.func @_inception_kernel(%arg0: i32, %arg1: memref<1x4x256xf32, #tpu.memory_space<vmem>>, %arg2: memref<24x4xf32, #tpu.memory_space<vmem>>, %arg3: memref<24x1xf32, #tpu.memory_space<vmem>>, %arg4: memref<8x72xf32, #tpu.memory_space<vmem>>, %arg5: memref<8x1xf32, #tpu.memory_space<vmem>>, %arg6: memref<8x200xf32, #tpu.memory_space<vmem>>, %arg7: memref<8x1xf32, #tpu.memory_space<vmem>>, %arg8: memref<8x4xf32, #tpu.memory_space<vmem>>, %arg9: memref<8x1xf32, #tpu.memory_space<vmem>>, %arg10: memref<1x32x256xf32, #tpu.memory_space<vmem>>) attributes {dimension_semantics = [#tpu.dimension_semantics<parallel>], iteration_bounds = array<i64: 2>, scalar_prefetch = 0 : i64, scratch_operands = 0 : i64, tpu.core_type = #tpu.core_type<tc>, window_params = [{transform_indices = @transform_0, window_bounds = array<i64: 1, 4, 256>}, {pipeline_mode = #tpu.pipeline_mode<synchronous>, transform_indices = @transform_1, window_bounds = array<i64: 24, 4>}, {pipeline_mode = #tpu.pipeline_mode<synchronous>, transform_indices = @transform_2, window_bounds = array<i64: 24, 1>}, {pipeline_mode = #tpu.pipeline_mode<synchronous>, transform_indices = @transform_3, window_bounds = array<i64: 8, 72>}, {pipeline_mode = #tpu.pipeline_mode<synchronous>, transform_indices = @transform_4, window_bounds = array<i64: 8, 1>}, {pipeline_mode = #tpu.pipeline_mode<synchronous>, transform_indices = @transform_5, window_bounds = array<i64: 8, 200>}, {pipeline_mode = #tpu.pipeline_mode<synchronous>, transform_indices = @transform_6, window_bounds = array<i64: 8, 1>}, {pipeline_mode = #tpu.pipeline_mode<synchronous>, transform_indices = @transform_7, window_bounds = array<i64: 8, 4>}, {pipeline_mode = #tpu.pipeline_mode<synchronous>, transform_indices = @transform_8, window_bounds = array<i64: 8, 1>}, {transform_indices = @transform_9, window_bounds = array<i64: 1, 32, 256>}]} {
    %c0 = arith.constant 0 : index
    %c0_0 = arith.constant 0 : index
    %c0_1 = arith.constant 0 : index
    %0 = vector.load %arg1[%c0, %c0_0, %c0_1] : memref<1x4x256xf32, #tpu.memory_space<vmem>>, vector<1x4x256xf32>
    %1 = vector.shape_cast %0 : vector<1x4x256xf32> to vector<4x256xf32>
    %2 = tpu.iota {dimensions = array<i32: 1>} : vector<1x256xi32>
    %c15_i32 = arith.constant 15 : i32
    %3 = vector.broadcast %c15_i32 : i32 to vector<1x256xi32>
    %4 = arith.andi %2, %3 : vector<1x256xi32>
    %c0_2 = arith.constant 0 : index
    %c0_3 = arith.constant 0 : index
    %5 = vector.load %arg2[%c0_2, %c0_3] : memref<24x4xf32, #tpu.memory_space<vmem>>, vector<24x4xf32>
    %cst = arith.constant dense<0.000000e+00> : vector<24x256xf32>
    %6 = tpu.matmul %5, %1, %cst {dimension_numbers = #tpu.dot_dimension_numbers<[1], [0], [0], [1], [0, 0, 1, 1], [], []>} : vector<24x4xf32>, vector<4x256xf32>, vector<24x256xf32> -> vector<24x256xf32>
    %c0_4 = arith.constant 0 : index
    %c0_5 = arith.constant 0 : index
    %7 = vector.load %arg3[%c0_4, %c0_5] : memref<24x1xf32, #tpu.memory_space<vmem>>, vector<24x1xf32>
    %8 = vector.broadcast %7 : vector<24x1xf32> to vector<24x256xf32>
    %9 = arith.addf %6, %8 : vector<24x256xf32>
    %cst_6 = arith.constant 0.000000e+00 : f32
    %10 = vector.broadcast %cst_6 : f32 to vector<24x256xf32>
    %11 = arith.maximumf %9, %10 : vector<24x256xf32>
    %12 = vector.extract_strided_slice %11 {offsets = [0, 0], sizes = [8, 256], strides = [1, 1]} : vector<24x256xf32> to vector<8x256xf32>
    %c0_7 = arith.constant 0 : index
    %c0_8 = arith.constant 0 : index
    %c0_9 = arith.constant 0 : index
    %13 = vector.load %arg10[%c0_7, %c0_8, %c0_9] : memref<1x32x256xf32, #tpu.memory_space<vmem>>, vector<1x8x256xf32>
    %14 = vector.shape_cast %13 : vector<1x8x256xf32> to vector<8x256xf32>
    %15 = vector.shape_cast %12 : vector<8x256xf32> to vector<1x8x256xf32>
    tpu.vector_store %arg10[%c0_7, %c0_8, %c0_9], %15 {strides = array<i32>} : memref<1x32x256xf32, #tpu.memory_space<vmem>>, vector<1x8x256xf32>,
    %16 = vector.extract_strided_slice %11 {offsets = [8, 0], sizes = [8, 256], strides = [1, 1]} : vector<24x256xf32> to vector<8x256xf32>
    %17 = vector.extract_strided_slice %11 {offsets = [16, 0], sizes = [8, 256], strides = [1, 1]} : vector<24x256xf32> to vector<8x256xf32>
    %c17_i32 = arith.constant 17 : i32
    %18 = tpu.dynamic_rotate %16 by %c17_i32 dim 1 : vector<8x256xf32>, i32 -> vector<8x256xf32>
    %c16_i32 = arith.constant 16 : i32
    %19 = vector.broadcast %c16_i32 : i32 to vector<1x256xi32>
    %20 = arith.cmpi sge, %2, %19 : vector<1x256xi32>
    %c1_i32 = arith.constant 1 : i32
    %21 = vector.broadcast %c1_i32 : i32 to vector<1x256xi32>
    %22 = arith.cmpi sge, %4, %21 : vector<1x256xi32>
    %23 = arith.andi %20, %22 : vector<1x256xi1>
    %cst_10 = arith.constant 0.000000e+00 : f32
    %24 = vector.shape_cast %23 : vector<1x256xi1> to vector<1x256xi1>
    %25 = vector.broadcast %24 : vector<1x256xi1> to vector<8x256xi1>
    %26 = vector.broadcast %cst_10 : f32 to vector<8x256xf32>
    %27 = arith.select %25, %18, %26 : vector<8x256xi1>, vector<8x256xf32>
    %c16_i32_11 = arith.constant 16 : i32
    %28 = tpu.dynamic_rotate %16 by %c16_i32_11 dim 1 : vector<8x256xf32>, i32 -> vector<8x256xf32>
    %c16_i32_12 = arith.constant 16 : i32
    %29 = vector.broadcast %c16_i32_12 : i32 to vector<1x256xi32>
    %30 = arith.cmpi sge, %2, %29 : vector<1x256xi32>
    %cst_13 = arith.constant 0.000000e+00 : f32
    %31 = vector.shape_cast %30 : vector<1x256xi1> to vector<1x256xi1>
    %32 = vector.broadcast %31 : vector<1x256xi1> to vector<8x256xi1>
    %33 = vector.broadcast %cst_13 : f32 to vector<8x256xf32>
    %34 = arith.select %32, %28, %33 : vector<8x256xi1>, vector<8x256xf32>
    %c15_i32_14 = arith.constant 15 : i32
    %35 = tpu.dynamic_rotate %16 by %c15_i32_14 dim 1 : vector<8x256xf32>, i32 -> vector<8x256xf32>
    %c16_i32_15 = arith.constant 16 : i32
    %36 = vector.broadcast %c16_i32_15 : i32 to vector<1x256xi32>
    %37 = arith.cmpi sge, %2, %36 : vector<1x256xi32>
    %c15_i32_16 = arith.constant 15 : i32
    %38 = vector.broadcast %c15_i32_16 : i32 to vector<1x256xi32>
    %39 = arith.cmpi slt, %4, %38 : vector<1x256xi32>
    %40 = arith.andi %37, %39 : vector<1x256xi1>
    %cst_17 = arith.constant 0.000000e+00 : f32
    %41 = vector.shape_cast %40 : vector<1x256xi1> to vector<1x256xi1>
    %42 = vector.broadcast %41 : vector<1x256xi1> to vector<8x256xi1>
    %43 = vector.broadcast %cst_17 : f32 to vector<8x256xf32>
    %44 = arith.select %42, %35, %43 : vector<8x256xi1>, vector<8x256xf32>
    %c1_i32_18 = arith.constant 1 : i32
    %45 = tpu.dynamic_rotate %16 by %c1_i32_18 dim 1 : vector<8x256xf32>, i32 -> vector<8x256xf32>
    %c1_i32_19 = arith.constant 1 : i32
    %46 = vector.broadcast %c1_i32_19 : i32 to vector<1x256xi32>
    %47 = arith.cmpi sge, %4, %46 : vector<1x256xi32>
    %cst_20 = arith.constant 0.000000e+00 : f32
    %48 = vector.shape_cast %47 : vector<1x256xi1> to vector<1x256xi1>
    %49 = vector.broadcast %48 : vector<1x256xi1> to vector<8x256xi1>
    %50 = vector.broadcast %cst_20 : f32 to vector<8x256xf32>
    %51 = arith.select %49, %45, %50 : vector<8x256xi1>, vector<8x256xf32>
    %c255_i32 = arith.constant 255 : i32
    %52 = tpu.dynamic_rotate %16 by %c255_i32 dim 1 : vector<8x256xf32>, i32 -> vector<8x256xf32>
    %c15_i32_21 = arith.constant 15 : i32
    %53 = vector.broadcast %c15_i32_21 : i32 to vector<1x256xi32>
    %54 = arith.cmpi slt, %4, %53 : vector<1x256xi32>
    %cst_22 = arith.constant 0.000000e+00 : f32
    %55 = vector.shape_cast %54 : vector<1x256xi1> to vector<1x256xi1>
    %56 = vector.broadcast %55 : vector<1x256xi1> to vector<8x256xi1>
    %57 = vector.broadcast %cst_22 : f32 to vector<8x256xf32>
    %58 = arith.select %56, %52, %57 : vector<8x256xi1>, vector<8x256xf32>
    %c241_i32 = arith.constant 241 : i32
    %59 = tpu.dynamic_rotate %16 by %c241_i32 dim 1 : vector<8x256xf32>, i32 -> vector<8x256xf32>
    %c240_i32 = arith.constant 240 : i32
    %60 = vector.broadcast %c240_i32 : i32 to vector<1x256xi32>
    %61 = arith.cmpi slt, %2, %60 : vector<1x256xi32>
    %c1_i32_23 = arith.constant 1 : i32
    %62 = vector.broadcast %c1_i32_23 : i32 to vector<1x256xi32>
    %63 = arith.cmpi sge, %4, %62 : vector<1x256xi32>
    %64 = arith.andi %61, %63 : vector<1x256xi1>
    %cst_24 = arith.constant 0.000000e+00 : f32
    %65 = vector.shape_cast %64 : vector<1x256xi1> to vector<1x256xi1>
    %66 = vector.broadcast %65 : vector<1x256xi1> to vector<8x256xi1>
    %67 = vector.broadcast %cst_24 : f32 to vector<8x256xf32>
    %68 = arith.select %66, %59, %67 : vector<8x256xi1>, vector<8x256xf32>
    %c240_i32_25 = arith.constant 240 : i32
    %69 = tpu.dynamic_rotate %16 by %c240_i32_25 dim 1 : vector<8x256xf32>, i32 -> vector<8x256xf32>
    %c240_i32_26 = arith.constant 240 : i32
    %70 = vector.broadcast %c240_i32_26 : i32 to vector<1x256xi32>
    %71 = arith.cmpi slt, %2, %70 : vector<1x256xi32>
    %cst_27 = arith.constant 0.000000e+00 : f32
    %72 = vector.shape_cast %71 : vector<1x256xi1> to vector<1x256xi1>
    %73 = vector.broadcast %72 : vector<1x256xi1> to vector<8x256xi1>
    %74 = vector.broadcast %cst_27 : f32 to vector<8x256xf32>
    %75 = arith.select %73, %69, %74 : vector<8x256xi1>, vector<8x256xf32>
    %c239_i32 = arith.constant 239 : i32
    %76 = tpu.dynamic_rotate %16 by %c239_i32 dim 1 : vector<8x256xf32>, i32 -> vector<8x256xf32>
    %c240_i32_28 = arith.constant 240 : i32
    %77 = vector.broadcast %c240_i32_28 : i32 to vector<1x256xi32>
    %78 = arith.cmpi slt, %2, %77 : vector<1x256xi32>
    %c15_i32_29 = arith.constant 15 : i32
    %79 = vector.broadcast %c15_i32_29 : i32 to vector<1x256xi32>
    %80 = arith.cmpi slt, %4, %79 : vector<1x256xi32>
    %81 = arith.andi %78, %80 : vector<1x256xi1>
    %cst_30 = arith.constant 0.000000e+00 : f32
    %82 = vector.shape_cast %81 : vector<1x256xi1> to vector<1x256xi1>
    %83 = vector.broadcast %82 : vector<1x256xi1> to vector<8x256xi1>
    %84 = vector.broadcast %cst_30 : f32 to vector<8x256xf32>
    %85 = arith.select %83, %76, %84 : vector<8x256xi1>, vector<8x256xf32>
    %86 = tpu.concatenate %27, %34, %44, %51, %16, %58, %68, %75, %85 in 0 : vector<8x256xf32>, vector<8x256xf32>, vector<8x256xf32>, vector<8x256xf32>, vector<8x256xf32>, vector<8x256xf32>, vector<8x256xf32>, vector<8x256xf32>, vector<8x256xf32> -> vector<72x256xf32>
    %c0_31 = arith.constant 0 : index
    %c0_32 = arith.constant 0 : index
    %87 = vector.load %arg4[%c0_31, %c0_32] : memref<8x72xf32, #tpu.memory_space<vmem>>, vector<8x72xf32>
    %cst_33 = arith.constant dense<0.000000e+00> : vector<8x256xf32>
    %88 = tpu.matmul %87, %86, %cst_33 {dimension_numbers = #tpu.dot_dimension_numbers<[1], [0], [0], [1], [0, 0, 1, 1], [], []>} : vector<8x72xf32>, vector<72x256xf32>, vector<8x256xf32> -> vector<8x256xf32>
    %c0_34 = arith.constant 0 : index
    %c0_35 = arith.constant 0 : index
    %89 = vector.load %arg5[%c0_34, %c0_35] : memref<8x1xf32, #tpu.memory_space<vmem>>, vector<8x1xf32>
    %90 = vector.broadcast %89 : vector<8x1xf32> to vector<8x256xf32>
    %91 = arith.addf %88, %90 : vector<8x256xf32>
    %cst_36 = arith.constant 0.000000e+00 : f32
    %92 = vector.broadcast %cst_36 : f32 to vector<8x256xf32>
    %93 = arith.maximumf %91, %92 : vector<8x256xf32>
    %c0_37 = arith.constant 0 : index
    %c8 = arith.constant 8 : index
    %c0_38 = arith.constant 0 : index
    %94 = vector.load %arg10[%c0_37, %c8, %c0_38] : memref<1x32x256xf32, #tpu.memory_space<vmem>>, vector<1x8x256xf32>
    %95 = vector.shape_cast %94 : vector<1x8x256xf32> to vector<8x256xf32>
    %96 = vector.shape_cast %93 : vector<8x256xf32> to vector<1x8x256xf32>
    tpu.vector_store %arg10[%c0_37, %c8, %c0_38], %96 {strides = array<i32>} : memref<1x32x256xf32, #tpu.memory_space<vmem>>, vector<1x8x256xf32>,
    %c34_i32 = arith.constant 34 : i32
    %97 = tpu.dynamic_rotate %17 by %c34_i32 dim 1 : vector<8x256xf32>, i32 -> vector<8x256xf32>
    %c32_i32 = arith.constant 32 : i32
    %98 = vector.broadcast %c32_i32 : i32 to vector<1x256xi32>
    %99 = arith.cmpi sge, %2, %98 : vector<1x256xi32>
    %c2_i32 = arith.constant 2 : i32
    %100 = vector.broadcast %c2_i32 : i32 to vector<1x256xi32>
    %101 = arith.cmpi sge, %4, %100 : vector<1x256xi32>
    %102 = arith.andi %99, %101 : vector<1x256xi1>
    %cst_39 = arith.constant 0.000000e+00 : f32
    %103 = vector.shape_cast %102 : vector<1x256xi1> to vector<1x256xi1>
    %104 = vector.broadcast %103 : vector<1x256xi1> to vector<8x256xi1>
    %105 = vector.broadcast %cst_39 : f32 to vector<8x256xf32>
    %106 = arith.select %104, %97, %105 : vector<8x256xi1>, vector<8x256xf32>
    %c33_i32 = arith.constant 33 : i32
    %107 = tpu.dynamic_rotate %17 by %c33_i32 dim 1 : vector<8x256xf32>, i32 -> vector<8x256xf32>
    %c32_i32_40 = arith.constant 32 : i32
    %108 = vector.broadcast %c32_i32_40 : i32 to vector<1x256xi32>
    %109 = arith.cmpi sge, %2, %108 : vector<1x256xi32>
    %c1_i32_41 = arith.constant 1 : i32
    %110 = vector.broadcast %c1_i32_41 : i32 to vector<1x256xi32>
    %111 = arith.cmpi sge, %4, %110 : vector<1x256xi32>
    %112 = arith.andi %109, %111 : vector<1x256xi1>
    %cst_42 = arith.constant 0.000000e+00 : f32
    %113 = vector.shape_cast %112 : vector<1x256xi1> to vector<1x256xi1>
    %114 = vector.broadcast %113 : vector<1x256xi1> to vector<8x256xi1>
    %115 = vector.broadcast %cst_42 : f32 to vector<8x256xf32>
    %116 = arith.select %114, %107, %115 : vector<8x256xi1>, vector<8x256xf32>
    %c32_i32_43 = arith.constant 32 : i32
    %117 = tpu.dynamic_rotate %17 by %c32_i32_43 dim 1 : vector<8x256xf32>, i32 -> vector<8x256xf32>
    %c32_i32_44 = arith.constant 32 : i32
    %118 = vector.broadcast %c32_i32_44 : i32 to vector<1x256xi32>
    %119 = arith.cmpi sge, %2, %118 : vector<1x256xi32>
    %cst_45 = arith.constant 0.000000e+00 : f32
    %120 = vector.shape_cast %119 : vector<1x256xi1> to vector<1x256xi1>
    %121 = vector.broadcast %120 : vector<1x256xi1> to vector<8x256xi1>
    %122 = vector.broadcast %cst_45 : f32 to vector<8x256xf32>
    %123 = arith.select %121, %117, %122 : vector<8x256xi1>, vector<8x256xf32>
    %c31_i32 = arith.constant 31 : i32
    %124 = tpu.dynamic_rotate %17 by %c31_i32 dim 1 : vector<8x256xf32>, i32 -> vector<8x256xf32>
    %c32_i32_46 = arith.constant 32 : i32
    %125 = vector.broadcast %c32_i32_46 : i32 to vector<1x256xi32>
    %126 = arith.cmpi sge, %2, %125 : vector<1x256xi32>
    %c15_i32_47 = arith.constant 15 : i32
    %127 = vector.broadcast %c15_i32_47 : i32 to vector<1x256xi32>
    %128 = arith.cmpi slt, %4, %127 : vector<1x256xi32>
    %129 = arith.andi %126, %128 : vector<1x256xi1>
    %cst_48 = arith.constant 0.000000e+00 : f32
    %130 = vector.shape_cast %129 : vector<1x256xi1> to vector<1x256xi1>
    %131 = vector.broadcast %130 : vector<1x256xi1> to vector<8x256xi1>
    %132 = vector.broadcast %cst_48 : f32 to vector<8x256xf32>
    %133 = arith.select %131, %124, %132 : vector<8x256xi1>, vector<8x256xf32>
    %c30_i32 = arith.constant 30 : i32
    %134 = tpu.dynamic_rotate %17 by %c30_i32 dim 1 : vector<8x256xf32>, i32 -> vector<8x256xf32>
    %c32_i32_49 = arith.constant 32 : i32
    %135 = vector.broadcast %c32_i32_49 : i32 to vector<1x256xi32>
    %136 = arith.cmpi sge, %2, %135 : vector<1x256xi32>
    %c14_i32 = arith.constant 14 : i32
    %137 = vector.broadcast %c14_i32 : i32 to vector<1x256xi32>
    %138 = arith.cmpi slt, %4, %137 : vector<1x256xi32>
    %139 = arith.andi %136, %138 : vector<1x256xi1>
    %cst_50 = arith.constant 0.000000e+00 : f32
    %140 = vector.shape_cast %139 : vector<1x256xi1> to vector<1x256xi1>
    %141 = vector.broadcast %140 : vector<1x256xi1> to vector<8x256xi1>
    %142 = vector.broadcast %cst_50 : f32 to vector<8x256xf32>
    %143 = arith.select %141, %134, %142 : vector<8x256xi1>, vector<8x256xf32>
    %c18_i32 = arith.constant 18 : i32
    %144 = tpu.dynamic_rotate %17 by %c18_i32 dim 1 : vector<8x256xf32>, i32 -> vector<8x256xf32>
    %c16_i32_51 = arith.constant 16 : i32
    %145 = vector.broadcast %c16_i32_51 : i32 to vector<1x256xi32>
    %146 = arith.cmpi sge, %2, %145 : vector<1x256xi32>
    %c2_i32_52 = arith.constant 2 : i32
    %147 = vector.broadcast %c2_i32_52 : i32 to vector<1x256xi32>
    %148 = arith.cmpi sge, %4, %147 : vector<1x256xi32>
    %149 = arith.andi %146, %148 : vector<1x256xi1>
    %cst_53 = arith.constant 0.000000e+00 : f32
    %150 = vector.shape_cast %149 : vector<1x256xi1> to vector<1x256xi1>
    %151 = vector.broadcast %150 : vector<1x256xi1> to vector<8x256xi1>
    %152 = vector.broadcast %cst_53 : f32 to vector<8x256xf32>
    %153 = arith.select %151, %144, %152 : vector<8x256xi1>, vector<8x256xf32>
    %c17_i32_54 = arith.constant 17 : i32
    %154 = tpu.dynamic_rotate %17 by %c17_i32_54 dim 1 : vector<8x256xf32>, i32 -> vector<8x256xf32>
    %cst_55 = arith.constant 0.000000e+00 : f32
    %155 = vector.shape_cast %23 : vector<1x256xi1> to vector<1x256xi1>
    %156 = vector.broadcast %155 : vector<1x256xi1> to vector<8x256xi1>
    %157 = vector.broadcast %cst_55 : f32 to vector<8x256xf32>
    %158 = arith.select %156, %154, %157 : vector<8x256xi1>, vector<8x256xf32>
    %c16_i32_56 = arith.constant 16 : i32
    %159 = tpu.dynamic_rotate %17 by %c16_i32_56 dim 1 : vector<8x256xf32>, i32 -> vector<8x256xf32>
    %cst_57 = arith.constant 0.000000e+00 : f32
    %160 = vector.shape_cast %30 : vector<1x256xi1> to vector<1x256xi1>
    %161 = vector.broadcast %160 : vector<1x256xi1> to vector<8x256xi1>
    %162 = vector.broadcast %cst_57 : f32 to vector<8x256xf32>
    %163 = arith.select %161, %159, %162 : vector<8x256xi1>, vector<8x256xf32>
    %c15_i32_58 = arith.constant 15 : i32
    %164 = tpu.dynamic_rotate %17 by %c15_i32_58 dim 1 : vector<8x256xf32>, i32 -> vector<8x256xf32>
    %cst_59 = arith.constant 0.000000e+00 : f32
    %165 = vector.shape_cast %40 : vector<1x256xi1> to vector<1x256xi1>
    %166 = vector.broadcast %165 : vector<1x256xi1> to vector<8x256xi1>
    %167 = vector.broadcast %cst_59 : f32 to vector<8x256xf32>
    %168 = arith.select %166, %164, %167 : vector<8x256xi1>, vector<8x256xf32>
    %c14_i32_60 = arith.constant 14 : i32
    %169 = tpu.dynamic_rotate %17 by %c14_i32_60 dim 1 : vector<8x256xf32>, i32 -> vector<8x256xf32>
    %c16_i32_61 = arith.constant 16 : i32
    %170 = vector.broadcast %c16_i32_61 : i32 to vector<1x256xi32>
    %171 = arith.cmpi sge, %2, %170 : vector<1x256xi32>
    %c14_i32_62 = arith.constant 14 : i32
    %172 = vector.broadcast %c14_i32_62 : i32 to vector<1x256xi32>
    %173 = arith.cmpi slt, %4, %172 : vector<1x256xi32>
    %174 = arith.andi %171, %173 : vector<1x256xi1>
    %cst_63 = arith.constant 0.000000e+00 : f32
    %175 = vector.shape_cast %174 : vector<1x256xi1> to vector<1x256xi1>
    %176 = vector.broadcast %175 : vector<1x256xi1> to vector<8x256xi1>
    %177 = vector.broadcast %cst_63 : f32 to vector<8x256xf32>
    %178 = arith.select %176, %169, %177 : vector<8x256xi1>, vector<8x256xf32>
    %c2_i32_64 = arith.constant 2 : i32
    %179 = tpu.dynamic_rotate %17 by %c2_i32_64 dim 1 : vector<8x256xf32>, i32 -> vector<8x256xf32>
    %c2_i32_65 = arith.constant 2 : i32
    %180 = vector.broadcast %c2_i32_65 : i32 to vector<1x256xi32>
    %181 = arith.cmpi sge, %4, %180 : vector<1x256xi32>
    %cst_66 = arith.constant 0.000000e+00 : f32
    %182 = vector.shape_cast %181 : vector<1x256xi1> to vector<1x256xi1>
    %183 = vector.broadcast %182 : vector<1x256xi1> to vector<8x256xi1>
    %184 = vector.broadcast %cst_66 : f32 to vector<8x256xf32>
    %185 = arith.select %183, %179, %184 : vector<8x256xi1>, vector<8x256xf32>
    %c1_i32_67 = arith.constant 1 : i32
    %186 = tpu.dynamic_rotate %17 by %c1_i32_67 dim 1 : vector<8x256xf32>, i32 -> vector<8x256xf32>
    %cst_68 = arith.constant 0.000000e+00 : f32
    %187 = vector.shape_cast %47 : vector<1x256xi1> to vector<1x256xi1>
    %188 = vector.broadcast %187 : vector<1x256xi1> to vector<8x256xi1>
    %189 = vector.broadcast %cst_68 : f32 to vector<8x256xf32>
    %190 = arith.select %188, %186, %189 : vector<8x256xi1>, vector<8x256xf32>
    %c255_i32_69 = arith.constant 255 : i32
    %191 = tpu.dynamic_rotate %17 by %c255_i32_69 dim 1 : vector<8x256xf32>, i32 -> vector<8x256xf32>
    %cst_70 = arith.constant 0.000000e+00 : f32
    %192 = vector.shape_cast %54 : vector<1x256xi1> to vector<1x256xi1>
    %193 = vector.broadcast %192 : vector<1x256xi1> to vector<8x256xi1>
    %194 = vector.broadcast %cst_70 : f32 to vector<8x256xf32>
    %195 = arith.select %193, %191, %194 : vector<8x256xi1>, vector<8x256xf32>
    %c254_i32 = arith.constant 254 : i32
    %196 = tpu.dynamic_rotate %17 by %c254_i32 dim 1 : vector<8x256xf32>, i32 -> vector<8x256xf32>
    %c14_i32_71 = arith.constant 14 : i32
    %197 = vector.broadcast %c14_i32_71 : i32 to vector<1x256xi32>
    %198 = arith.cmpi slt, %4, %197 : vector<1x256xi32>
    %cst_72 = arith.constant 0.000000e+00 : f32
    %199 = vector.shape_cast %198 : vector<1x256xi1> to vector<1x256xi1>
    %200 = vector.broadcast %199 : vector<1x256xi1> to vector<8x256xi1>
    %201 = vector.broadcast %cst_72 : f32 to vector<8x256xf32>
    %202 = arith.select %200, %196, %201 : vector<8x256xi1>, vector<8x256xf32>
    %c242_i32 = arith.constant 242 : i32
    %203 = tpu.dynamic_rotate %17 by %c242_i32 dim 1 : vector<8x256xf32>, i32 -> vector<8x256xf32>
    %c240_i32_73 = arith.constant 240 : i32
    %204 = vector.broadcast %c240_i32_73 : i32 to vector<1x256xi32>
    %205 = arith.cmpi slt, %2, %204 : vector<1x256xi32>
    %c2_i32_74 = arith.constant 2 : i32
    %206 = vector.broadcast %c2_i32_74 : i32 to vector<1x256xi32>
    %207 = arith.cmpi sge, %4, %206 : vector<1x256xi32>
    %208 = arith.andi %205, %207 : vector<1x256xi1>
    %cst_75 = arith.constant 0.000000e+00 : f32
    %209 = vector.shape_cast %208 : vector<1x256xi1> to vector<1x256xi1>
    %210 = vector.broadcast %209 : vector<1x256xi1> to vector<8x256xi1>
    %211 = vector.broadcast %cst_75 : f32 to vector<8x256xf32>
    %212 = arith.select %210, %203, %211 : vector<8x256xi1>, vector<8x256xf32>
    %c241_i32_76 = arith.constant 241 : i32
    %213 = tpu.dynamic_rotate %17 by %c241_i32_76 dim 1 : vector<8x256xf32>, i32 -> vector<8x256xf32>
    %cst_77 = arith.constant 0.000000e+00 : f32
    %214 = vector.shape_cast %64 : vector<1x256xi1> to vector<1x256xi1>
    %215 = vector.broadcast %214 : vector<1x256xi1> to vector<8x256xi1>
    %216 = vector.broadcast %cst_77 : f32 to vector<8x256xf32>
    %217 = arith.select %215, %213, %216 : vector<8x256xi1>, vector<8x256xf32>
    %c240_i32_78 = arith.constant 240 : i32
    %218 = tpu.dynamic_rotate %17 by %c240_i32_78 dim 1 : vector<8x256xf32>, i32 -> vector<8x256xf32>
    %cst_79 = arith.constant 0.000000e+00 : f32
    %219 = vector.shape_cast %71 : vector<1x256xi1> to vector<1x256xi1>
    %220 = vector.broadcast %219 : vector<1x256xi1> to vector<8x256xi1>
    %221 = vector.broadcast %cst_79 : f32 to vector<8x256xf32>
    %222 = arith.select %220, %218, %221 : vector<8x256xi1>, vector<8x256xf32>
    %c239_i32_80 = arith.constant 239 : i32
    %223 = tpu.dynamic_rotate %17 by %c239_i32_80 dim 1 : vector<8x256xf32>, i32 -> vector<8x256xf32>
    %cst_81 = arith.constant 0.000000e+00 : f32
    %224 = vector.shape_cast %81 : vector<1x256xi1> to vector<1x256xi1>
    %225 = vector.broadcast %224 : vector<1x256xi1> to vector<8x256xi1>
    %226 = vector.broadcast %cst_81 : f32 to vector<8x256xf32>
    %227 = arith.select %225, %223, %226 : vector<8x256xi1>, vector<8x256xf32>
    %c238_i32 = arith.constant 238 : i32
    %228 = tpu.dynamic_rotate %17 by %c238_i32 dim 1 : vector<8x256xf32>, i32 -> vector<8x256xf32>
    %c240_i32_82 = arith.constant 240 : i32
    %229 = vector.broadcast %c240_i32_82 : i32 to vector<1x256xi32>
    %230 = arith.cmpi slt, %2, %229 : vector<1x256xi32>
    %c14_i32_83 = arith.constant 14 : i32
    %231 = vector.broadcast %c14_i32_83 : i32 to vector<1x256xi32>
    %232 = arith.cmpi slt, %4, %231 : vector<1x256xi32>
    %233 = arith.andi %230, %232 : vector<1x256xi1>
    %cst_84 = arith.constant 0.000000e+00 : f32
    %234 = vector.shape_cast %233 : vector<1x256xi1> to vector<1x256xi1>
    %235 = vector.broadcast %234 : vector<1x256xi1> to vector<8x256xi1>
    %236 = vector.broadcast %cst_84 : f32 to vector<8x256xf32>
    %237 = arith.select %235, %228, %236 : vector<8x256xi1>, vector<8x256xf32>
    %c226_i32 = arith.constant 226 : i32
    %238 = tpu.dynamic_rotate %17 by %c226_i32 dim 1 : vector<8x256xf32>, i32 -> vector<8x256xf32>
    %c224_i32 = arith.constant 224 : i32
    %239 = vector.broadcast %c224_i32 : i32 to vector<1x256xi32>
    %240 = arith.cmpi slt, %2, %239 : vector<1x256xi32>
    %c2_i32_85 = arith.constant 2 : i32
    %241 = vector.broadcast %c2_i32_85 : i32 to vector<1x256xi32>
    %242 = arith.cmpi sge, %4, %241 : vector<1x256xi32>
    %243 = arith.andi %240, %242 : vector<1x256xi1>
    %cst_86 = arith.constant 0.000000e+00 : f32
    %244 = vector.shape_cast %243 : vector<1x256xi1> to vector<1x256xi1>
    %245 = vector.broadcast %244 : vector<1x256xi1> to vector<8x256xi1>
    %246 = vector.broadcast %cst_86 : f32 to vector<8x256xf32>
    %247 = arith.select %245, %238, %246 : vector<8x256xi1>, vector<8x256xf32>
    %c225_i32 = arith.constant 225 : i32
    %248 = tpu.dynamic_rotate %17 by %c225_i32 dim 1 : vector<8x256xf32>, i32 -> vector<8x256xf32>
    %c224_i32_87 = arith.constant 224 : i32
    %249 = vector.broadcast %c224_i32_87 : i32 to vector<1x256xi32>
    %250 = arith.cmpi slt, %2, %249 : vector<1x256xi32>
    %c1_i32_88 = arith.constant 1 : i32
    %251 = vector.broadcast %c1_i32_88 : i32 to vector<1x256xi32>
    %252 = arith.cmpi sge, %4, %251 : vector<1x256xi32>
    %253 = arith.andi %250, %252 : vector<1x256xi1>
    %cst_89 = arith.constant 0.000000e+00 : f32
    %254 = vector.shape_cast %253 : vector<1x256xi1> to vector<1x256xi1>
    %255 = vector.broadcast %254 : vector<1x256xi1> to vector<8x256xi1>
    %256 = vector.broadcast %cst_89 : f32 to vector<8x256xf32>
    %257 = arith.select %255, %248, %256 : vector<8x256xi1>, vector<8x256xf32>
    %c224_i32_90 = arith.constant 224 : i32
    %258 = tpu.dynamic_rotate %17 by %c224_i32_90 dim 1 : vector<8x256xf32>, i32 -> vector<8x256xf32>
    %c224_i32_91 = arith.constant 224 : i32
    %259 = vector.broadcast %c224_i32_91 : i32 to vector<1x256xi32>
    %260 = arith.cmpi slt, %2, %259 : vector<1x256xi32>
    %cst_92 = arith.constant 0.000000e+00 : f32
    %261 = vector.shape_cast %260 : vector<1x256xi1> to vector<1x256xi1>
    %262 = vector.broadcast %261 : vector<1x256xi1> to vector<8x256xi1>
    %263 = vector.broadcast %cst_92 : f32 to vector<8x256xf32>
    %264 = arith.select %262, %258, %263 : vector<8x256xi1>, vector<8x256xf32>
    %c223_i32 = arith.constant 223 : i32
    %265 = tpu.dynamic_rotate %17 by %c223_i32 dim 1 : vector<8x256xf32>, i32 -> vector<8x256xf32>
    %c224_i32_93 = arith.constant 224 : i32
    %266 = vector.broadcast %c224_i32_93 : i32 to vector<1x256xi32>
    %267 = arith.cmpi slt, %2, %266 : vector<1x256xi32>
    %c15_i32_94 = arith.constant 15 : i32
    %268 = vector.broadcast %c15_i32_94 : i32 to vector<1x256xi32>
    %269 = arith.cmpi slt, %4, %268 : vector<1x256xi32>
    %270 = arith.andi %267, %269 : vector<1x256xi1>
    %cst_95 = arith.constant 0.000000e+00 : f32
    %271 = vector.shape_cast %270 : vector<1x256xi1> to vector<1x256xi1>
    %272 = vector.broadcast %271 : vector<1x256xi1> to vector<8x256xi1>
    %273 = vector.broadcast %cst_95 : f32 to vector<8x256xf32>
    %274 = arith.select %272, %265, %273 : vector<8x256xi1>, vector<8x256xf32>
    %c222_i32 = arith.constant 222 : i32
    %275 = tpu.dynamic_rotate %17 by %c222_i32 dim 1 : vector<8x256xf32>, i32 -> vector<8x256xf32>
    %c224_i32_96 = arith.constant 224 : i32
    %276 = vector.broadcast %c224_i32_96 : i32 to vector<1x256xi32>
    %277 = arith.cmpi slt, %2, %276 : vector<1x256xi32>
    %c14_i32_97 = arith.constant 14 : i32
    %278 = vector.broadcast %c14_i32_97 : i32 to vector<1x256xi32>
    %279 = arith.cmpi slt, %4, %278 : vector<1x256xi32>
    %280 = arith.andi %277, %279 : vector<1x256xi1>
    %cst_98 = arith.constant 0.000000e+00 : f32
    %281 = vector.shape_cast %280 : vector<1x256xi1> to vector<1x256xi1>
    %282 = vector.broadcast %281 : vector<1x256xi1> to vector<8x256xi1>
    %283 = vector.broadcast %cst_98 : f32 to vector<8x256xf32>
    %284 = arith.select %282, %275, %283 : vector<8x256xi1>, vector<8x256xf32>
    %285 = tpu.concatenate %106, %116, %123, %133, %143, %153, %158, %163, %168, %178, %185, %190, %17, %195, %202, %212 in 0 : vector<8x256xf32>, vector<8x256xf32>, vector<8x256xf32>, vector<8x256xf32>, vector<8x256xf32>, vector<8x256xf32>, vector<8x256xf32>, vector<8x256xf32>, vector<8x256xf32>, vector<8x256xf32>, vector<8x256xf32>, vector<8x256xf32>, vector<8x256xf32>, vector<8x256xf32>, vector<8x256xf32>, vector<8x256xf32> -> vector<128x256xf32>
    %286 = tpu.concatenate %217, %222, %227, %237, %247, %257, %264, %274, %284 in 0 : vector<8x256xf32>, vector<8x256xf32>, vector<8x256xf32>, vector<8x256xf32>, vector<8x256xf32>, vector<8x256xf32>, vector<8x256xf32>, vector<8x256xf32>, vector<8x256xf32> -> vector<72x256xf32>
    %287 = tpu.concatenate %285, %286 in 0 : vector<128x256xf32>, vector<72x256xf32> -> vector<200x256xf32>
    %c0_99 = arith.constant 0 : index
    %c0_100 = arith.constant 0 : index
    %288 = vector.load %arg6[%c0_99, %c0_100] : memref<8x200xf32, #tpu.memory_space<vmem>>, vector<8x200xf32>
    %cst_101 = arith.constant dense<0.000000e+00> : vector<8x256xf32>
    %289 = tpu.matmul %288, %287, %cst_101 {dimension_numbers = #tpu.dot_dimension_numbers<[1], [0], [0], [1], [0, 0, 1, 1], [], []>} : vector<8x200xf32>, vector<200x256xf32>, vector<8x256xf32> -> vector<8x256xf32>
    %c0_102 = arith.constant 0 : index
    %c0_103 = arith.constant 0 : index
    %290 = vector.load %arg7[%c0_102, %c0_103] : memref<8x1xf32, #tpu.memory_space<vmem>>, vector<8x1xf32>
    %291 = vector.broadcast %290 : vector<8x1xf32> to vector<8x256xf32>
    %292 = arith.addf %289, %291 : vector<8x256xf32>
    %cst_104 = arith.constant 0.000000e+00 : f32
    %293 = vector.broadcast %cst_104 : f32 to vector<8x256xf32>
    %294 = arith.maximumf %292, %293 : vector<8x256xf32>
    %c0_105 = arith.constant 0 : index
    %c16 = arith.constant 16 : index
    %c0_106 = arith.constant 0 : index
    %295 = vector.load %arg10[%c0_105, %c16, %c0_106] : memref<1x32x256xf32, #tpu.memory_space<vmem>>, vector<1x8x256xf32>
    %296 = vector.shape_cast %295 : vector<1x8x256xf32> to vector<8x256xf32>
    %297 = vector.shape_cast %294 : vector<8x256xf32> to vector<1x8x256xf32>
    tpu.vector_store %arg10[%c0_105, %c16, %c0_106], %297 {strides = array<i32>} : memref<1x32x256xf32, #tpu.memory_space<vmem>>, vector<1x8x256xf32>,
    %c17_i32_107 = arith.constant 17 : i32
    %298 = tpu.dynamic_rotate %1 by %c17_i32_107 dim 1 : vector<4x256xf32>, i32 -> vector<4x256xf32>
    %cst_108 = arith.constant -3.40282347E+38 : f32
    %299 = vector.shape_cast %23 : vector<1x256xi1> to vector<1x256xi1>
    %300 = vector.broadcast %299 : vector<1x256xi1> to vector<4x256xi1>
    %301 = vector.broadcast %cst_108 : f32 to vector<4x256xf32>
    %302 = arith.select %300, %298, %301 : vector<4x256xi1>, vector<4x256xf32>
    %303 = arith.maximumf %1, %302 : vector<4x256xf32>
    %c16_i32_109 = arith.constant 16 : i32
    %304 = tpu.dynamic_rotate %1 by %c16_i32_109 dim 1 : vector<4x256xf32>, i32 -> vector<4x256xf32>
    %cst_110 = arith.constant -3.40282347E+38 : f32
    %305 = vector.shape_cast %30 : vector<1x256xi1> to vector<1x256xi1>
    %306 = vector.broadcast %305 : vector<1x256xi1> to vector<4x256xi1>
    %307 = vector.broadcast %cst_110 : f32 to vector<4x256xf32>
    %308 = arith.select %306, %304, %307 : vector<4x256xi1>, vector<4x256xf32>
    %309 = arith.maximumf %303, %308 : vector<4x256xf32>
    %c15_i32_111 = arith.constant 15 : i32
    %310 = tpu.dynamic_rotate %1 by %c15_i32_111 dim 1 : vector<4x256xf32>, i32 -> vector<4x256xf32>
    %cst_112 = arith.constant -3.40282347E+38 : f32
    %311 = vector.shape_cast %40 : vector<1x256xi1> to vector<1x256xi1>
    %312 = vector.broadcast %311 : vector<1x256xi1> to vector<4x256xi1>
    %313 = vector.broadcast %cst_112 : f32 to vector<4x256xf32>
    %314 = arith.select %312, %310, %313 : vector<4x256xi1>, vector<4x256xf32>
    %315 = arith.maximumf %309, %314 : vector<4x256xf32>
    %c1_i32_113 = arith.constant 1 : i32
    %316 = tpu.dynamic_rotate %1 by %c1_i32_113 dim 1 : vector<4x256xf32>, i32 -> vector<4x256xf32>
    %cst_114 = arith.constant -3.40282347E+38 : f32
    %317 = vector.shape_cast %47 : vector<1x256xi1> to vector<1x256xi1>
    %318 = vector.broadcast %317 : vector<1x256xi1> to vector<4x256xi1>
    %319 = vector.broadcast %cst_114 : f32 to vector<4x256xf32>
    %320 = arith.select %318, %316, %319 : vector<4x256xi1>, vector<4x256xf32>
    %321 = arith.maximumf %315, %320 : vector<4x256xf32>
    %c255_i32_115 = arith.constant 255 : i32
    %322 = tpu.dynamic_rotate %1 by %c255_i32_115 dim 1 : vector<4x256xf32>, i32 -> vector<4x256xf32>
    %cst_116 = arith.constant -3.40282347E+38 : f32
    %323 = vector.shape_cast %54 : vector<1x256xi1> to vector<1x256xi1>
    %324 = vector.broadcast %323 : vector<1x256xi1> to vector<4x256xi1>
    %325 = vector.broadcast %cst_116 : f32 to vector<4x256xf32>
    %326 = arith.select %324, %322, %325 : vector<4x256xi1>, vector<4x256xf32>
    %327 = arith.maximumf %321, %326 : vector<4x256xf32>
    %c241_i32_117 = arith.constant 241 : i32
    %328 = tpu.dynamic_rotate %1 by %c241_i32_117 dim 1 : vector<4x256xf32>, i32 -> vector<4x256xf32>
    %cst_118 = arith.constant -3.40282347E+38 : f32
    %329 = vector.shape_cast %64 : vector<1x256xi1> to vector<1x256xi1>
    %330 = vector.broadcast %329 : vector<1x256xi1> to vector<4x256xi1>
    %331 = vector.broadcast %cst_118 : f32 to vector<4x256xf32>
    %332 = arith.select %330, %328, %331 : vector<4x256xi1>, vector<4x256xf32>
    %333 = arith.maximumf %327, %332 : vector<4x256xf32>
    %c240_i32_119 = arith.constant 240 : i32
    %334 = tpu.dynamic_rotate %1 by %c240_i32_119 dim 1 : vector<4x256xf32>, i32 -> vector<4x256xf32>
    %cst_120 = arith.constant -3.40282347E+38 : f32
    %335 = vector.shape_cast %71 : vector<1x256xi1> to vector<1x256xi1>
    %336 = vector.broadcast %335 : vector<1x256xi1> to vector<4x256xi1>
    %337 = vector.broadcast %cst_120 : f32 to vector<4x256xf32>
    %338 = arith.select %336, %334, %337 : vector<4x256xi1>, vector<4x256xf32>
    %339 = arith.maximumf %333, %338 : vector<4x256xf32>
    %c239_i32_121 = arith.constant 239 : i32
    %340 = tpu.dynamic_rotate %1 by %c239_i32_121 dim 1 : vector<4x256xf32>, i32 -> vector<4x256xf32>
    %cst_122 = arith.constant -3.40282347E+38 : f32
    %341 = vector.shape_cast %81 : vector<1x256xi1> to vector<1x256xi1>
    %342 = vector.broadcast %341 : vector<1x256xi1> to vector<4x256xi1>
    %343 = vector.broadcast %cst_122 : f32 to vector<4x256xf32>
    %344 = arith.select %342, %340, %343 : vector<4x256xi1>, vector<4x256xf32>
    %345 = arith.maximumf %339, %344 : vector<4x256xf32>
    %c0_123 = arith.constant 0 : index
    %c0_124 = arith.constant 0 : index
    %346 = vector.load %arg8[%c0_123, %c0_124] : memref<8x4xf32, #tpu.memory_space<vmem>>, vector<8x4xf32>
    %cst_125 = arith.constant dense<0.000000e+00> : vector<8x256xf32>
    %347 = tpu.matmul %346, %345, %cst_125 {dimension_numbers = #tpu.dot_dimension_numbers<[1], [0], [0], [1], [0, 0, 1, 1], [], []>} : vector<8x4xf32>, vector<4x256xf32>, vector<8x256xf32> -> vector<8x256xf32>
    %c0_126 = arith.constant 0 : index
    %c0_127 = arith.constant 0 : index
    %348 = vector.load %arg9[%c0_126, %c0_127] : memref<8x1xf32, #tpu.memory_space<vmem>>, vector<8x1xf32>
    %349 = vector.broadcast %348 : vector<8x1xf32> to vector<8x256xf32>
    %350 = arith.addf %347, %349 : vector<8x256xf32>
    %cst_128 = arith.constant 0.000000e+00 : f32
    %351 = vector.broadcast %cst_128 : f32 to vector<8x256xf32>
    %352 = arith.maximumf %350, %351 : vector<8x256xf32>
    %c0_129 = arith.constant 0 : index
    %c24 = arith.constant 24 : index
    %c0_130 = arith.constant 0 : index
    %353 = vector.load %arg10[%c0_129, %c24, %c0_130] : memref<1x32x256xf32, #tpu.memory_space<vmem>>, vector<1x8x256xf32>
    %354 = vector.shape_cast %353 : vector<1x8x256xf32> to vector<8x256xf32>
    %355 = vector.shape_cast %352 : vector<8x256xf32> to vector<1x8x256xf32>
    tpu.vector_store %arg10[%c0_129, %c24, %c0_130], %355 {strides = array<i32>} : memref<1x32x256xf32, #tpu.memory_space<vmem>>, vector<1x8x256xf32>,
    return
  }
  func.func @transform_0(%arg0: i32) -> (i32, i32, i32) {
    %c0_i32 = arith.constant 0 : i32
    %c0_i32_0 = arith.constant 0 : i32
    %c0_i32_1 = arith.constant 0 : i32
    return %arg0, %c0_i32, %c0_i32_0 : i32, i32, i32
  }
  func.func @transform_1(%arg0: i32) -> (i32, i32) {
    %c0_i32 = arith.constant 0 : i32
    %c0_i32_0 = arith.constant 0 : i32
    %c0_i32_1 = arith.constant 0 : i32
    return %c0_i32, %c0_i32_0 : i32, i32
  }
  func.func @transform_2(%arg0: i32) -> (i32, i32) {
    %c0_i32 = arith.constant 0 : i32
    %c0_i32_0 = arith.constant 0 : i32
    %c0_i32_1 = arith.constant 0 : i32
    return %c0_i32, %c0_i32_0 : i32, i32
  }
  func.func @transform_3(%arg0: i32) -> (i32, i32) {
    %c0_i32 = arith.constant 0 : i32
    %c0_i32_0 = arith.constant 0 : i32
    %c0_i32_1 = arith.constant 0 : i32
    return %c0_i32, %c0_i32_0 : i32, i32
  }
  func.func @transform_4(%arg0: i32) -> (i32, i32) {
    %c0_i32 = arith.constant 0 : i32
    %c0_i32_0 = arith.constant 0 : i32
    %c0_i32_1 = arith.constant 0 : i32
    return %c0_i32, %c0_i32_0 : i32, i32
  }
  func.func @transform_5(%arg0: i32) -> (i32, i32) {
    %c0_i32 = arith.constant 0 : i32
    %c0_i32_0 = arith.constant 0 : i32
    %c0_i32_1 = arith.constant 0 : i32
    return %c0_i32, %c0_i32_0 : i32, i32
  }
  func.func @transform_6(%arg0: i32) -> (i32, i32) {
    %c0_i32 = arith.constant 0 : i32
    %c0_i32_0 = arith.constant 0 : i32
    %c0_i32_1 = arith.constant 0 : i32
    return %c0_i32, %c0_i32_0 : i32, i32
  }
  func.func @transform_7(%arg0: i32) -> (i32, i32) {
    %c0_i32 = arith.constant 0 : i32
    %c0_i32_0 = arith.constant 0 : i32
    %c0_i32_1 = arith.constant 0 : i32
    return %c0_i32, %c0_i32_0 : i32, i32
  }
  func.func @transform_8(%arg0: i32) -> (i32, i32) {
    %c0_i32 = arith.constant 0 : i32
    %c0_i32_0 = arith.constant 0 : i32
    %c0_i32_1 = arith.constant 0 : i32
    return %c0_i32, %c0_i32_0 : i32, i32
  }
  func.func @transform_9(%arg0: i32) -> (i32, i32, i32) {
    %c0_i32 = arith.constant 0 : i32
    %c0_i32_0 = arith.constant 0 : i32
    %c0_i32_1 = arith.constant 0 : i32
    return %arg0, %c0_i32, %c0_i32_0 : i32, i32, i32
  }
}

</mosaic_0001>

<llo_original>
// kernel: inception_forward.1
$region0: #{inception_forward.1}
  #allocation0 [shape = 'u32[]', space=smem, size = 0x4, offset = 0x4, fixed_abs, tag = 'smem constant byte address 0x4 - core index']
  #allocation1 [shape = 'u32[144,128]{1,0:T(1,128)}', space=vmem, size = 0x12000, scoped, tag = 'internal scratch']
  %s0 = inlined_call_operand.vmem [shape: f32[2,4,256], index: 0, kind: input, shape index: {}]
  %s1 = inlined_call_operand.vmem [shape: f32[24,4], index: 1, kind: input, shape index: {}]
  %s2 = inlined_call_operand.vmem [shape: f32[24,1], index: 2, kind: input, shape index: {}]
  %s3 = inlined_call_operand.vmem [shape: f32[8,72], index: 3, kind: input, shape index: {}]
  %s4 = inlined_call_operand.vmem [shape: f32[8,1], index: 4, kind: input, shape index: {}]
  %s5 = inlined_call_operand.vmem [shape: f32[8,200], index: 5, kind: input, shape index: {}]
  %s6 = inlined_call_operand.vmem [shape: f32[8,1], index: 6, kind: input, shape index: {}]
  %s7 = inlined_call_operand.vmem [shape: f32[8,4], index: 7, kind: input, shape index: {}]
  %s8 = inlined_call_operand.vmem [shape: f32[8,1], index: 8, kind: input, shape index: {}]
  %s9 = inlined_call_operand.vmem [shape: f32[2,32,256], index: 9, kind: output, shape index: {}]
  %s10 = sld [smem:[#allocation0]]
  $region69: #{inception_forward.1} parent=0
    _
  %s12 = ssub.s32 1, %s10
  %s13 = scalar_select 0, %s12, %s10
  loop: start=0, step=1, limit=4
  $region2: #{inception_forward.1} parent=0 // loop_pre_header
    _
  $region3: #{inception_forward.1} parent=0 // loop_header
    %s15 = sphi 0, %s19
    %p16 = scmp.ge.s32.totalorder %s15, 4
    %s25 = sphi 0, %s27
    %s28 = sphi 0, %s25
    %s29 = sphi 0, %s28
    %s45 = sphi 0, %s29
    %s49 = sphi 0, %s49
    %s51 = sphi 0, %s49
    %s52 = sphi 0, %s51
    %s66 = sphi 0, %s52
    %s70 = sphi 0, %s70
    %s72 = sphi 0, %s70
    %s73 = sphi 0, %s72
    %s87 = sphi 0, %s73
    %s91 = sphi 0, %s91
    %s93 = sphi 0, %s91
    %s94 = sphi 0, %s93
    %s108 = sphi 0, %s94
    %s112 = sphi 0, %s112
    %s114 = sphi 0, %s112
    %s115 = sphi 0, %s114
    %s129 = sphi 0, %s115
    %s133 = sphi 0, %s133
    %s135 = sphi 0, %s133
    %s136 = sphi 0, %s135
    %s150 = sphi 0, %s136
    %s154 = sphi 0, %s154
    %s156 = sphi 0, %s154
    %s157 = sphi 0, %s156
    %s171 = sphi 0, %s157
    %s175 = sphi 0, %s175
    %s177 = sphi 0, %s175
    %s178 = sphi 0, %s177
    %s192 = sphi 0, %s178
    %s196 = sphi 0, %s196
    %s198 = sphi 0, %s196
    %s199 = sphi 0, %s198
    %s213 = sphi 0, %s199
    %s219 = sphi 0, %s221
    %s222 = sphi 0, %s219
    %s223 = sphi 0, %s222
    %s239 = sphi 0, %s223
  $region4: #{inception_forward.1} parent=0 // loop_header_branch
    %18 = sbr.rel (%p16) target = $region8
  $region5: #{inception_forward.1} parent=0 // loop_body
    %s20 = ssub.s32 %s15, 1
    %s21 = ssub.s32 %s15, 2
    %s22 = sadd.s32 %s15, 1
    %s23 = ssub.s32 %s15, %s22
    %p24 = scmp.eq.s32.totalorder %s23, 0
    %s26 = sadd.s32 %s25, 1
    %s27 = scalar_select %p24, %s25, %s26
    %p30 = pneg %p24
    %p31 = scmp.eq.s32.totalorder %s15, 1
    %p32 = por %p30, %p31
    %p33 = scmp.ne.s32.totalorder %s25, %s28
    %p34 = scmp.eq.s32.totalorder %s15, 0
    %p35 = por %p33, %p34
    %p36 = scmp.ne.s32.totalorder %s25, %s28
    %p37 = scmp.eq.s32.totalorder %s20, 1
    %p38 = por %p36, %p37
    %p39 = scmp.ne.s32.totalorder %s28, %s29
    %p40 = scmp.eq.s32.totalorder %s20, 0
    %p41 = por %p39, %p40
    %p42 = scmp.ne.s32.totalorder %s28, %s29
    %p43 = scmp.eq.s32.totalorder %s21, 1
    %p44 = por %p42, %p43
    %p46 = scmp.ne.s32.totalorder %s29, %s45
    %p47 = scmp.eq.s32.totalorder %s21, 0
    %p48 = por %p46, %p47
    %s50 = sadd.s32 %s49, 1
    %p53 = scmp.eq.s32.totalorder %s15, 1
    %p54 = scmp.ne.s32.totalorder %s49, %s51
    %p55 = scmp.eq.s32.totalorder %s15, 0
    %p56 = por %p54, %p55
    %p57 = scmp.ne.s32.totalorder %s49, %s51
    %p58 = scmp.eq.s32.totalorder %s20, 1
    %p59 = por %p57, %p58
    %p60 = scmp.ne.s32.totalorder %s51, %s52
    %p61 = scmp.eq.s32.totalorder %s20, 0
    %p62 = por %p60, %p61
    %p63 = scmp.ne.s32.totalorder %s51, %s52
    %p64 = scmp.eq.s32.totalorder %s21, 1
    %p65 = por %p63, %p64
    %p67 = scmp.ne.s32.totalorder %s52, %s66
    %p68 = scmp.eq.s32.totalorder %s21, 0
    %p69 = por %p67, %p68
    %s71 = sadd.s32 %s70, 1
    %p74 = scmp.eq.s32.totalorder %s15, 1
    %p75 = scmp.ne.s32.totalorder %s70, %s72
    %p76 = scmp.eq.s32.totalorder %s15, 0
    %p77 = por %p75, %p76
    %p78 = scmp.ne.s32.totalorder %s70, %s72
    %p79 = scmp.eq.s32.totalorder %s20, 1
    %p80 = por %p78, %p79
    %p81 = scmp.ne.s32.totalorder %s72, %s73
    %p82 = scmp.eq.s32.totalorder %s20, 0
    %p83 = por %p81, %p82
    %p84 = scmp.ne.s32.totalorder %s72, %s73
    %p85 = scmp.eq.s32.totalorder %s21, 1
    %p86 = por %p84, %p85
    %p88 = scmp.ne.s32.totalorder %s73, %s87
    %p89 = scmp.eq.s32.totalorder %s21, 0
    %p90 = por %p88, %p89
    %s92 = sadd.s32 %s91, 1
    %p95 = scmp.eq.s32.totalorder %s15, 1
    %p96 = scmp.ne.s32.totalorder %s91, %s93
    %p97 = scmp.eq.s32.totalorder %s15, 0
    %p98 = por %p96, %p97
    %p99 = scmp.ne.s32.totalorder %s91, %s93
    %p100 = scmp.eq.s32.totalorder %s20, 1
    %p101 = por %p99, %p100
    %p102 = scmp.ne.s32.totalorder %s93, %s94
    %p103 = scmp.eq.s32.totalorder %s20, 0
    %p104 = por %p102, %p103
    %p105 = scmp.ne.s32.totalorder %s93, %s94
    %p106 = scmp.eq.s32.totalorder %s21, 1
    %p107 = por %p105, %p106
    %p109 = scmp.ne.s32.totalorder %s94, %s108
    %p110 = scmp.eq.s32.totalorder %s21, 0
    %p111 = por %p109, %p110
    %s113 = sadd.s32 %s112, 1
    %p116 = scmp.eq.s32.totalorder %s15, 1
    %p117 = scmp.ne.s32.totalorder %s112, %s114
    %p118 = scmp.eq.s32.totalorder %s15, 0
    %p119 = por %p117, %p118
    %p120 = scmp.ne.s32.totalorder %s112, %s114
    %p121 = scmp.eq.s32.totalorder %s20, 1
    %p122 = por %p120, %p121
    %p123 = scmp.ne.s32.totalorder %s114, %s115
    %p124 = scmp.eq.s32.totalorder %s20, 0
    %p125 = por %p123, %p124
    %p126 = scmp.ne.s32.totalorder %s114, %s115
    %p127 = scmp.eq.s32.totalorder %s21, 1
    %p128 = por %p126, %p127
    %p130 = scmp.ne.s32.totalorder %s115, %s129
    %p131 = scmp.eq.s32.totalorder %s21, 0
    %p132 = por %p130, %p131
    %s134 = sadd.s32 %s133, 1
    %p137 = scmp.eq.s32.totalorder %s15, 1
    %p138 = scmp.ne.s32.totalorder %s133, %s135
    %p139 = scmp.eq.s32.totalorder %s15, 0
    %p140 = por %p138, %p139
    %p141 = scmp.ne.s32.totalorder %s133, %s135
    %p142 = scmp.eq.s32.totalorder %s20, 1
    %p143 = por %p141, %p142
    %p144 = scmp.ne.s32.totalorder %s135, %s136
    %p145 = scmp.eq.s32.totalorder %s20, 0
    %p146 = por %p144, %p145
    %p147 = scmp.ne.s32.totalorder %s135, %s136
    %p148 = scmp.eq.s32.totalorder %s21, 1
    %p149 = por %p147, %p148
    %p151 = scmp.ne.s32.totalorder %s136, %s150
    %p152 = scmp.eq.s32.totalorder %s21, 0
    %p153 = por %p151, %p152
    %s155 = sadd.s32 %s154, 1
    %p158 = scmp.eq.s32.totalorder %s15, 1
    %p159 = scmp.ne.s32.totalorder %s154, %s156
    %p160 = scmp.eq.s32.totalorder %s15, 0
    %p161 = por %p159, %p160
    %p162 = scmp.ne.s32.totalorder %s154, %s156
    %p163 = scmp.eq.s32.totalorder %s20, 1
    %p164 = por %p162, %p163
    %p165 = scmp.ne.s32.totalorder %s156, %s157
    %p166 = scmp.eq.s32.totalorder %s20, 0
    %p167 = por %p165, %p166
    %p168 = scmp.ne.s32.totalorder %s156, %s157
    %p169 = scmp.eq.s32.totalorder %s21, 1
    %p170 = por %p168, %p169
    %p172 = scmp.ne.s32.totalorder %s157, %s171
    %p173 = scmp.eq.s32.totalorder %s21, 0
    %p174 = por %p172, %p173
    %s176 = sadd.s32 %s175, 1
    %p179 = scmp.eq.s32.totalorder %s15, 1
    %p180 = scmp.ne.s32.totalorder %s175, %s177
    %p181 = scmp.eq.s32.totalorder %s15, 0
    %p182 = por %p180, %p181
    %p183 = scmp.ne.s32.totalorder %s175, %s177
    %p184 = scmp.eq.s32.totalorder %s20, 1
    %p185 = por %p183, %p184
    %p186 = scmp.ne.s32.totalorder %s177, %s178
    %p187 = scmp.eq.s32.totalorder %s20, 0
    %p188 = por %p186, %p187
    %p189 = scmp.ne.s32.totalorder %s177, %s178
    %p190 = scmp.eq.s32.totalorder %s21, 1
    %p191 = por %p189, %p190
    %p193 = scmp.ne.s32.totalorder %s178, %s192
    %p194 = scmp.eq.s32.totalorder %s21, 0
    %p195 = por %p193, %p194
    %s197 = sadd.s32 %s196, 1
    %p200 = scmp.eq.s32.totalorder %s15, 1
    %p201 = scmp.ne.s32.totalorder %s196, %s198
    %p202 = scmp.eq.s32.totalorder %s15, 0
    %p203 = por %p201, %p202
    %p204 = scmp.ne.s32.totalorder %s196, %s198
    %p205 = scmp.eq.s32.totalorder %s20, 1
    %p206 = por %p204, %p205
    %p207 = scmp.ne.s32.totalorder %s198, %s199
    %p208 = scmp.eq.s32.totalorder %s20, 0
    %p209 = por %p207, %p208
    %p210 = scmp.ne.s32.totalorder %s198, %s199
    %p211 = scmp.eq.s32.totalorder %s21, 1
    %p212 = por %p210, %p211
    %p214 = scmp.ne.s32.totalorder %s199, %s213
    %p215 = scmp.eq.s32.totalorder %s21, 0
    %p216 = por %p214, %p215
    %s217 = ssub.s32 %s15, %s22
    %p218 = scmp.eq.s32.totalorder %s217, 0
    %s220 = sadd.s32 %s219, 1
    %s221 = scalar_select %p218, %s219, %s220
    %p224 = pneg %p218
    %p225 = scmp.eq.s32.totalorder %s15, 1
    %p226 = por %p224, %p225
    %p227 = scmp.ne.s32.totalorder %s219, %s222
    %p228 = scmp.eq.s32.totalorder %s15, 0
    %p229 = por %p227, %p228
    %p230 = scmp.ne.s32.totalorder %s219, %s222
    %p231 = scmp.eq.s32.totalorder %s20, 1
    %p232 = por %p230, %p231
    %p233 = scmp.ne.s32.totalorder %s222, %s223
    %p234 = scmp.eq.s32.totalorder %s20, 0
    %p235 = por %p233, %p234
    %p236 = scmp.ne.s32.totalorder %s222, %s223
    %p237 = scmp.eq.s32.totalorder %s21, 1
    %p238 = por %p236, %p237
    %p240 = scmp.ne.s32.totalorder %s223, %s239
    %p241 = scmp.eq.s32.totalorder %s21, 0
    %p242 = por %p240, %p241
    %p243 = scmp.le.s32.totalorder 1, %s15
    %p244 = scmp.lt.s32.totalorder %s15, 3
    %p245 = pnand %p243, %p244
    %p246 = pneg %p245
    // Predicated region
    $region9: #{inception_forward.1} parent=5 // pred_check
      _
    $region10: #{inception_forward.1} parent=5 // pred_check_branch
      %248 = sbr.rel (%p245) target = $region12
    $region11: #{inception_forward.1} parent=5 // pred_region
      %s249 = ssub.s32 %s15, 1
      // Predicated region
      $region13: #{inception_forward.1} parent=11 // pred_check
        %p250 = pneg %p62
      $region14: #{inception_forward.1} parent=11 // pred_check_branch
        %252 = sbr.rel (%p250) target = $region16
      $region15: #{inception_forward.1} parent=11 // pred_region
        _
      $region16: #{inception_forward.1} parent=11 // pred_fallthru
        _
      // Predicated region
      $region17: #{inception_forward.1} parent=11 // pred_check
        %p253 = pneg %p83
      $region18: #{inception_forward.1} parent=11 // pred_check_branch
        %255 = sbr.rel (%p253) target = $region20
      $region19: #{inception_forward.1} parent=11 // pred_region
        _
      $region20: #{inception_forward.1} parent=11 // pred_fallthru
        _
      // Predicated region
      $region21: #{inception_forward.1} parent=11 // pred_check
        %p256 = pneg %p104
      $region22: #{inception_forward.1} parent=11 // pred_check_branch
        %258 = sbr.rel (%p256) target = $region24
      $region23: #{inception_forward.1} parent=11 // pred_region
        _
      $region24: #{inception_forward.1} parent=11 // pred_fallthru
        _
      // Predicated region
      $region25: #{inception_forward.1} parent=11 // pred_check
        %p259 = pneg %p125
      $region26: #{inception_forward.1} parent=11 // pred_check_branch
        %261 = sbr.rel (%p259) target = $region28
      $region27: #{inception_forward.1} parent=11 // pred_region
        _
      $region28: #{inception_forward.1} parent=11 // pred_fallthru
        _
      // Predicated region
      $region29: #{inception_forward.1} parent=11 // pred_check
        %p262 = pneg %p146
      $region30: #{inception_forward.1} parent=11 // pred_check_branch
        %264 = sbr.rel (%p262) target = $region32
      $region31: #{inception_forward.1} parent=11 // pred_region
        _
      $region32: #{inception_forward.1} parent=11 // pred_fallthru
        _
      // Predicated region
      $region33: #{inception_forward.1} parent=11 // pred_check
        %p265 = pneg %p167
      $region34: #{inception_forward.1} parent=11 // pred_check_branch
        %267 = sbr.rel (%p265) target = $region36
      $region35: #{inception_forward.1} parent=11 // pred_region
        _
      $region36: #{inception_forward.1} parent=11 // pred_fallthru
        _
      // Predicated region
      $region37: #{inception_forward.1} parent=11 // pred_check
        %p268 = pneg %p188
      $region38: #{inception_forward.1} parent=11 // pred_check_branch
        %270 = sbr.rel (%p268) target = $region40
      $region39: #{inception_forward.1} parent=11 // pred_region
        _
      $region40: #{inception_forward.1} parent=11 // pred_fallthru
        _
      // Predicated region
      $region41: #{inception_forward.1} parent=11 // pred_check
        %p271 = pneg %p209
      $region42: #{inception_forward.1} parent=11 // pred_check_branch
        %273 = sbr.rel (%p271) target = $region44
      $region43: #{inception_forward.1} parent=11 // pred_region
        _
      $region44: #{inception_forward.1} parent=11 // pred_fallthru
        _
    $region12: #{inception_forward.1} parent=5 // pred_fallthru
      _
    %p274 = scmp.lt.s32.totalorder %s15, 2
    // Predicated region
    $region45: #{inception_forward.1} parent=5 // pred_check
      %p275 = pneg %p274
    $region46: #{inception_forward.1} parent=5 // pred_check_branch
      %277 = sbr.rel (%p275) target = $region48
    $region47: #{inception_forward.1} parent=5 // pred_region
      // Predicated region
      $region49: #{inception_forward.1} parent=47 // pred_check
        %p278 = pneg %p35
      $region50: #{inception_forward.1} parent=47 // pred_check_branch
        %280 = sbr.rel (%p278) target = $region52
      $region51: #{inception_forward.1} parent=47 // pred_region
        %p281 = scmp.lt.s32.totalorder %s15, 1
        %s282 = scalar_select %p281, %s15, 1
        %s283 = smul.addr %s282, 2
        %s284 = smul.addr %s283, 4
        %s285 = scalar_lea.vmem %s0, %s284
      $region52: #{inception_forward.1} parent=47 // pred_fallthru
        _
    $region48: #{inception_forward.1} parent=5 // pred_fallthru
      _
    %p286 = scmp.le.s32.totalorder 1, %s15
    %p287 = scmp.lt.s32.totalorder %s15, 3
    %p288 = pnand %p286, %p287
    %p289 = pneg %p288
    // Predicated region
    $region53: #{inception_forward.1} parent=5 // pred_check
      _
    $region54: #{inception_forward.1} parent=5 // pred_check_branch
      %291 = sbr.rel (%p288) target = $region56
    $region55: #{inception_forward.1} parent=5 // pred_region
      %s292 = ssub.s32 %s15, 1
      %p293 = scmp.lt.s32.totalorder %s20, 1
      %s294 = scalar_select %p293, %s20, 1
      %s295 = smul.addr %s294, 2
      %s296 = smul.addr %s295, 4
      %s297 = scalar_lea.vmem %s0, %s296
      %p298 = pneg %p41
      %p299 = pneg %p38
      %p300 = pneg %p62
      %p301 = pneg %p59
      %p302 = pneg %p83
      %p303 = pneg %p80
      %p304 = pneg %p104
      %p305 = pneg %p101
      %p306 = pneg %p125
      %p307 = pneg %p122
      %p308 = pneg %p146
      %p309 = pneg %p143
      %p310 = pneg %p167
      %p311 = pneg %p164
      %p312 = pneg %p188
      %p313 = pneg %p185
      %p314 = pneg %p209
      %p315 = pneg %p206
      %p316 = pneg %p235
      %p317 = pneg %p232
      %p318 = scmp.lt.s32.totalorder %s20, 1
      %s319 = scalar_select %p318, %s20, 1
      %s320 = smul.addr %s319, 8
      %s321 = smul.addr %s320, 8
      %s322 = scalar_lea.vmem %s9, %s321
      %p323 = scmp.lt.s32.totalorder %s20, 1
      %s324 = scalar_select %p323, %s20, 1
      %s325 = smul.addr %s324, 2
      %s326 = smul.addr %s325, 4
      %s327 = scalar_lea.vmem %s0, %s326
      %p328 = scmp.lt.s32.totalorder %s20, 1
      %s329 = scalar_select %p328, %s20, 1
      %s330 = smul.addr %s329, 8
      %s331 = smul.addr %s330, 8
      %s332 = scalar_lea.vmem %s9, %s331
      %v333 = vld [vmem:[%s327] sm:$0xff]
      %v334 = vlaneseq
      %v335 = vand.u32 %v334, 127
      %v336 = vadd.s32 %v335, 128
      %v337 = vand.u32 %v335, 15
      %v338 = vand.u32 %v336, 15
      %v339 = vld [vmem:[%s1] sm:$0xff]
      %v340 = vld [vmem:[%s1 + $0x8] sm:$0xff]
      %v341 = vld [vmem:[%s1 + $0x10] sm:$0xff]
      %v342 = vld [vmem:[%s2] sm:$0xff]
      %v343 = vld [vmem:[%s2 + $0x8] sm:$0xff]
      %v344 = vld [vmem:[%s2 + $0x10] sm:$0xff]
      %346 = vset.pattern.permute.xlu0 0
      %347 = vperm.xlu0 %346, %v342
      %v348 = vpop.permute.xlu0 %347
      %351 = vset.pattern.permute.xlu0 0
      %352 = vperm.xlu0 %351, %v343
      %v353 = vpop.permute.xlu0 %352
      %356 = vset.pattern.permute.xlu0 0
      %357 = vperm.xlu0 %356, %v344
      %v358 = vpop.permute.xlu0 %357
      %v361 = vcombine.high %v333, %v333
      %vm362 = vcmask 31744
      %v364 = vsel %vm362, %v339, 0
      %v367 = vsel %vm362, %v340, 0
      %v370 = vsel %vm362, %v341, 0
      %vm372 = vcmask 1043456
      %v373 = vsel %vm372, %v333, 0
      %v375 = vsel %vm372, %v361, 0
      %377 = vmatprep.subr.mxu0 0.0
      %378 = vmatpush1.msra.mxu0 0.0
      %379 = vmatprep.subr.mxu0 0.0
      %380 = vmatpush1.msra.mxu0 0.0
      %381 = vmatprep.subr.mxu0 0.0
      %382 = vmatpush1.msra.mxu0 0.0
      %383 = vmatprep.subr.mxu0 0.0
      %384 = vmatpush1.msra.mxu0 0.0
      %385 = vmatprep.subr.mxu0 0.0
      %386 = vmatpush1.msra.mxu0 0.0
      %387 = vmatprep.subr.mxu0 0.0
      %388 = vmatpush1.msra.mxu0 0.0
      %389 = vmatprep.subr.mxu0 0.0
      %390 = vmatpush1.msra.mxu0 0.0
      %391 = vmatprep.subr.mxu0 0.0
      %392 = vmatpush1.msra.mxu0 0.0
      %393 = vmatprep.subr.mxu0 0.0
      %394 = vmatpush1.msra.mxu0 0.0
      %395 = vmatprep.subr.mxu0 0.0
      %396 = vmatpush1.msra.mxu0 0.0
      %397 = vmatprep.subr.mxu0 0.0
      %398 = vmatpush1.msra.mxu0 0.0
      %399 = vmatprep.subr.mxu0 0.0
      %400 = vmatpush1.msra.mxu0 0.0
      %401 = vmatprep.subr.mxu0 0.0
      %402 = vmatpush1.msra.mxu0 0.0
      %403 = vmatprep.subr.mxu0 0.0
      %404 = vmatpush1.msra.mxu0 0.0
      %405 = vmatprep.subr.mxu0 0.0
      %406 = vmatpush1.msra.mxu0 0.0
      %407 = vmatprep.subr.mxu0 %v375
      %408 = vmatpush1.msra.mxu0 %v373
      %409 = vmatprep.subr.mxu0 0.0
      %410 = vmatpush2.msra.mxu0 0.0
      %411 = vmatprep.subr.mxu0 0.0
      %412 = vmatpush2.msra.mxu0 0.0
      %413 = vmatprep.subr.mxu0 0.0
      %414 = vmatpush2.msra.mxu0 0.0
      %415 = vmatprep.subr.mxu0 0.0
      %416 = vmatpush2.msra.mxu0 0.0
      %417 = vmatprep.subr.mxu0 0.0
      %418 = vmatpush2.msra.mxu0 0.0
      %419 = vmatprep.subr.mxu0 0.0
      %420 = vmatpush2.msra.mxu0 0.0
      %421 = vmatprep.subr.mxu0 0.0
      %422 = vmatpush2.msra.mxu0 0.0
      %423 = vmatprep.subr.mxu0 0.0
      %424 = vmatpush2.msra.mxu0 0.0
      %425 = vmatprep.subr.mxu0 0.0
      %426 = vmatpush2.msra.mxu0 0.0
      %427 = vmatprep.subr.mxu0 0.0
      %428 = vmatpush2.msra.mxu0 0.0
      %429 = vmatprep.subr.mxu0 0.0
      %430 = vmatpush2.msra.mxu0 0.0
      %431 = vmatprep.subr.mxu0 0.0
      %432 = vmatpush2.msra.mxu0 0.0
      %433 = vmatprep.subr.mxu0 0.0
      %434 = vmatpush2.msra.mxu0 0.0
      %435 = vmatprep.subr.mxu0 0.0
      %436 = vmatpush2.msra.mxu0 0.0
      %437 = vmatprep.subr.mxu0 0.0
      %438 = vmatpush2.msra.mxu0 0.0
      %439 = vmatprep.subr.mxu0 0.0
      %440 = vmatpush2.msra.mxu0 0.0
      %441 = vmatprep.mubr.f32.mxu0 0.0
      %442 = vmatmul.mubr.f32.gmra.mxu0 %v364
      %v443 = vpop.f32.mrf.mxu0
      %v444 = vadd.f32 %v348, %v443
      %v445 = vpop.f32.mrf.mxu0
      %v446 = vadd.f32 %v348, %v445
      %447 = vmatprep.mubr.f32.mxu0 0.0
      %448 = vmatmul.mubr.f32.gmra.mxu0 %v367
      %v449 = vpop.f32.mrf.mxu0
      %v450 = vadd.f32 %v353, %v449
      %v451 = vpop.f32.mrf.mxu0
      %v452 = vadd.f32 %v353, %v451
      %453 = vmatprep.mubr.f32.mxu0 0.0
      %454 = vmatmul.mubr.f32.gmra.mxu0 %v370
      %v455 = vpop.f32.mrf.mxu0
      %v456 = vadd.f32 %v358, %v455
      %v457 = vpop.f32.mrf.mxu0
      %v458 = vadd.f32 %v358, %v457
      %459 = vdwg.mxu0
      %v460 = vmax.f32 %v444, 0.0
      %v461 = vmax.f32 %v446, 0.0
      %v462 = vmax.f32 %v450, 0.0
      %v463 = vmax.f32 %v452, 0.0
      %v464 = vmax.f32 %v456, 0.0
      %v465 = vmax.f32 %v458, 0.0
      %466 = vst [vmem:[%s332] sm:$0xff] %v460
      %467 = vst [vmem:[%s332 + $0x8] sm:$0xff] %v461
      %468 = vrot.lane.b32.xlu0 %v462, 17
      %v469 = vpop.permute.xlu0 %468
      %470 = vrot.lane.b32.xlu0 %v463, 17
      %v471 = vpop.permute.xlu0 %470
      %vm472 = vcmp.lt.s32.totalorder %v335, 17
      %v473 = vsel %vm472, %v469, %v471
      %v474 = vsel %vm472, %v471, %v469
      %vm475 = vcmp.ge.s32.totalorder %v335, 16
      %vm476 = vcmp.ge.s32.totalorder %v336, 16
      %vm477 = vcmp.ge.s32.totalorder %v337, 1
      %vm478 = vcmp.ge.s32.totalorder %v338, 1
      %vm479 = vmand %vm475, %vm477
      %vm480 = vmand %vm476, %vm478
      %v481 = vsel %vm479, 1, 0
      %v482 = vsel %vm480, 1, 0
      %vm483 = vcmp.eq.s32.totalorder %v481, 1
      %vm484 = vcmp.eq.s32.totalorder %v482, 1
      %v485 = vsel %vm483, %v474, 0.0
      %v486 = vsel %vm484, %v473, 0.0
      %487 = vrot.lane.b32.xlu0 %v462, 16
      %v488 = vpop.permute.xlu0 %487
      %489 = vrot.lane.b32.xlu0 %v463, 16
      %v490 = vpop.permute.xlu0 %489
      %vm491 = vcmp.lt.s32.totalorder %v335, 16
      %v492 = vsel %vm491, %v488, %v490
      %v493 = vsel %vm491, %v490, %v488
      %v494 = vsel %vm475, 1, 0
      %v495 = vsel %vm476, 1, 0
      %vm496 = vcmp.eq.s32.totalorder %v494, 1
      %vm497 = vcmp.eq.s32.totalorder %v495, 1
      %v498 = vsel %vm496, %v493, 0.0
      %v499 = vsel %vm497, %v492, 0.0
      %500 = vrot.lane.b32.xlu0 %v462, 15
      %v501 = vpop.permute.xlu0 %500
      %502 = vrot.lane.b32.xlu0 %v463, 15
      %v503 = vpop.permute.xlu0 %502
      %vm504 = vcmp.lt.s32.totalorder %v335, 15
      %v505 = vsel %vm504, %v501, %v503
      %v506 = vsel %vm504, %v503, %v501
      %vm507 = vcmp.lt.s32.totalorder %v337, 15
      %vm508 = vcmp.lt.s32.totalorder %v338, 15
      %vm509 = vmand %vm475, %vm507
      %vm510 = vmand %vm476, %vm508
      %v511 = vsel %vm509, 1, 0
      %v512 = vsel %vm510, 1, 0
      %vm513 = vcmp.eq.s32.totalorder %v511, 1
      %vm514 = vcmp.eq.s32.totalorder %v512, 1
      %v515 = vsel %vm513, %v506, 0.0
      %v516 = vsel %vm514, %v505, 0.0
      %517 = vrot.lane.b32.xlu0 %v462, 1
      %v518 = vpop.permute.xlu0 %517
      %519 = vrot.lane.b32.xlu0 %v463, 1
      %v520 = vpop.permute.xlu0 %519
      %vm521 = vcmp.lt.s32.totalorder %v335, 1
      %v522 = vsel %vm521, %v518, %v520
      %v523 = vsel %vm521, %v520, %v518
      %v524 = vsel %vm477, 1, 0
      %v525 = vsel %vm478, 1, 0
      %vm526 = vcmp.eq.s32.totalorder %v524, 1
      %vm527 = vcmp.eq.s32.totalorder %v525, 1
      %v528 = vsel %vm526, %v523, 0.0
      %v529 = vsel %vm527, %v522, 0.0
      %530 = vrot.lane.b32.xlu0 %v462, 127
      %v531 = vpop.permute.xlu0 %530
      %532 = vrot.lane.b32.xlu0 %v463, 127
      %v533 = vpop.permute.xlu0 %532
      %vm534 = vcmp.lt.s32.totalorder %v335, 127
      %v535 = vsel %vm534, %v531, %v533
      %v536 = vsel %vm534, %v533, %v531
      %v537 = vsel %vm507, 1, 0
      %v538 = vsel %vm508, 1, 0
      %vm539 = vcmp.eq.s32.totalorder %v537, 1
      %vm540 = vcmp.eq.s32.totalorder %v538, 1
      %v541 = vsel %vm539, %v535, 0.0
      %v542 = vsel %vm540, %v536, 0.0
      %543 = vrot.lane.b32.xlu0 %v462, 113
      %v544 = vpop.permute.xlu0 %543
      %545 = vrot.lane.b32.xlu0 %v463, 113
      %v546 = vpop.permute.xlu0 %545
      %vm547 = vcmp.lt.s32.totalorder %v335, 113
      %v548 = vsel %vm547, %v544, %v546
      %v549 = vsel %vm547, %v546, %v544
      %vm550 = vcmp.lt.s32.totalorder %v335, 240
      %vm551 = vcmp.lt.s32.totalorder %v336, 240
      %vm552 = vmand %vm550, %vm477
      %vm553 = vmand %vm551, %vm478
      %v554 = vsel %vm552, 1, 0
      %v555 = vsel %vm553, 1, 0
      %vm556 = vcmp.eq.s32.totalorder %v554, 1
      %vm557 = vcmp.eq.s32.totalorder %v555, 1
      %v558 = vsel %vm556, %v548, 0.0
      %v559 = vsel %vm557, %v549, 0.0
      %560 = vrot.lane.b32.xlu0 %v462, 112
      %v561 = vpop.permute.xlu0 %560
      %562 = vrot.lane.b32.xlu0 %v463, 112
      %v563 = vpop.permute.xlu0 %562
      %vm564 = vcmp.lt.s32.totalorder %v335, 112
      %v565 = vsel %vm564, %v561, %v563
      %v566 = vsel %vm564, %v563, %v561
      %v567 = vsel %vm550, 1, 0
      %v568 = vsel %vm551, 1, 0
      %vm569 = vcmp.eq.s32.totalorder %v567, 1
      %vm570 = vcmp.eq.s32.totalorder %v568, 1
      %v571 = vsel %vm569, %v565, 0.0
      %v572 = vsel %vm570, %v566, 0.0
      %573 = vrot.lane.b32.xlu0 %v462, 111
      %v574 = vpop.permute.xlu0 %573
      %575 = vrot.lane.b32.xlu0 %v463, 111
      %v576 = vpop.permute.xlu0 %575
      %vm577 = vcmp.lt.s32.totalorder %v335, 111
      %v578 = vsel %vm577, %v574, %v576
      %v579 = vsel %vm577, %v576, %v574
      %vm580 = vmand %vm550, %vm507
      %vm581 = vmand %vm551, %vm508
      %v582 = vsel %vm580, 1, 0
      %v583 = vsel %vm581, 1, 0
      %vm584 = vcmp.eq.s32.totalorder %v582, 1
      %vm585 = vcmp.eq.s32.totalorder %v583, 1
      %v586 = vsel %vm584, %v578, 0.0
      %v587 = vsel %vm585, %v579, 0.0
      %v588 = vld [vmem:[%s3] sm:$0xff]
      %v589 = vld [vmem:[%s4] sm:$0xff]
      %591 = vset.pattern.permute.xlu0 0
      %592 = vperm.xlu0 %591, %v589
      %v593 = vpop.permute.xlu0 %592
      %vm595 = vcmask 588800
      %v597 = vsel %vm595, %v588, 0
      %599 = vmatprep.subr.mxu0 0.0
      %600 = vmatpush1.msra.mxu0 0.0
      %601 = vmatprep.subr.mxu0 0.0
      %602 = vmatpush1.msra.mxu0 0.0
      %603 = vmatprep.subr.mxu0 0.0
      %604 = vmatpush1.msra.mxu0 0.0
      %605 = vmatprep.subr.mxu0 0.0
      %606 = vmatpush1.msra.mxu0 0.0
      %607 = vmatprep.subr.mxu0 0.0
      %608 = vmatpush1.msra.mxu0 0.0
      %609 = vmatprep.subr.mxu0 0.0
      %610 = vmatpush1.msra.mxu0 0.0
      %611 = vmatprep.subr.mxu0 0.0
      %612 = vmatpush1.msra.mxu0 0.0
      %613 = vmatprep.subr.mxu0 %v587
      %614 = vmatpush1.msra.mxu0 %v586
      %615 = vmatprep.subr.mxu0 %v572
      %616 = vmatpush1.msra.mxu0 %v571
      %617 = vmatprep.subr.mxu0 %v559
      %618 = vmatpush1.msra.mxu0 %v558
      %619 = vmatprep.subr.mxu0 %v542
      %620 = vmatpush1.msra.mxu0 %v541
      %621 = vmatprep.subr.mxu0 %v463
      %622 = vmatpush1.msra.mxu0 %v462
      %623 = vmatprep.subr.mxu0 %v529
      %624 = vmatpush1.msra.mxu0 %v528
      %625 = vmatprep.subr.mxu0 %v516
      %626 = vmatpush1.msra.mxu0 %v515
      %627 = vmatprep.subr.mxu0 %v499
      %628 = vmatpush1.msra.mxu0 %v498
      %629 = vmatprep.subr.mxu0 %v486
      %630 = vmatpush1.msra.mxu0 %v485
      %631 = vmatprep.subr.mxu0 0.0
      %632 = vmatpush2.msra.mxu0 0.0
      %633 = vmatprep.subr.mxu0 0.0
      %634 = vmatpush2.msra.mxu0 0.0
      %635 = vmatprep.subr.mxu0 0.0
      %636 = vmatpush2.msra.mxu0 0.0
      %637 = vmatprep.subr.mxu0 0.0
      %638 = vmatpush2.msra.mxu0 0.0
      %639 = vmatprep.subr.mxu0 0.0
      %640 = vmatpush2.msra.mxu0 0.0
      %641 = vmatprep.subr.mxu0 0.0
      %642 = vmatpush2.msra.mxu0 0.0
      %643 = vmatprep.subr.mxu0 0.0
      %644 = vmatpush2.msra.mxu0 0.0
      %645 = vmatprep.subr.mxu0 0.0
      %646 = vmatpush2.msra.mxu0 0.0
      %647 = vmatprep.subr.mxu0 0.0
      %648 = vmatpush2.msra.mxu0 0.0
      %649 = vmatprep.subr.mxu0 0.0
      %650 = vmatpush2.msra.mxu0 0.0
      %651 = vmatprep.subr.mxu0 0.0
      %652 = vmatpush2.msra.mxu0 0.0
      %653 = vmatprep.subr.mxu0 0.0
      %654 = vmatpush2.msra.mxu0 0.0
      %655 = vmatprep.subr.mxu0 0.0
      %656 = vmatpush2.msra.mxu0 0.0
      %657 = vmatprep.subr.mxu0 0.0
      %658 = vmatpush2.msra.mxu0 0.0
      %659 = vmatprep.subr.mxu0 0.0
      %660 = vmatpush2.msra.mxu0 0.0
      %661 = vmatprep.subr.mxu0 0.0
      %662 = vmatpush2.msra.mxu0 0.0
      %663 = vmatprep.mubr.f32.mxu0 0.0
      %664 = vmatmul.mubr.f32.gmra.mxu0 %v597
      %v665 = vpop.f32.mrf.mxu0
      %v666 = vadd.f32 %v593, %v665
      %v667 = vpop.f32.mrf.mxu0
      %v668 = vadd.f32 %v593, %v667
      %669 = vdwg.mxu0
      %v670 = vmax.f32 %v666, 0.0
      %v671 = vmax.f32 %v668, 0.0
      %672 = vst [vmem:[%s332 + $0x10] sm:$0xff] %v670
      %673 = vst [vmem:[%s332 + $0x18] sm:$0xff] %v671
      %674 = vrot.lane.b32.xlu0 %v464, 34
      %v675 = vpop.permute.xlu0 %674
      %676 = vrot.lane.b32.xlu0 %v465, 34
      %v677 = vpop.permute.xlu0 %676
      %vm678 = vcmp.lt.s32.totalorder %v335, 34
      %v679 = vsel %vm678, %v675, %v677
      %v680 = vsel %vm678, %v677, %v675
      %vm681 = vcmp.ge.s32.totalorder %v335, 32
      %vm682 = vcmp.ge.s32.totalorder %v336, 32
      %vm683 = vcmp.ge.s32.totalorder %v337, 2
      %vm684 = vcmp.ge.s32.totalorder %v338, 2
      %vm685 = vmand %vm681, %vm683
      %vm686 = vmand %vm682, %vm684
      %v687 = vsel %vm685, 1, 0
      %v688 = vsel %vm686, 1, 0
      %vm689 = vcmp.eq.s32.totalorder %v687, 1
      %vm690 = vcmp.eq.s32.totalorder %v688, 1
      %v691 = vsel %vm689, %v680, 0.0
      %v692 = vsel %vm690, %v679, 0.0
      %693 = vrot.lane.b32.xlu0 %v464, 33
      %v694 = vpop.permute.xlu0 %693
      %695 = vrot.lane.b32.xlu0 %v465, 33
      %v696 = vpop.permute.xlu0 %695
      %vm697 = vcmp.lt.s32.totalorder %v335, 33
      %v698 = vsel %vm697, %v694, %v696
      %v699 = vsel %vm697, %v696, %v694
      %vm700 = vmand %vm681, %vm477
      %vm701 = vmand %vm682, %vm478
      %v702 = vsel %vm700, 1, 0
      %v703 = vsel %vm701, 1, 0
      %vm704 = vcmp.eq.s32.totalorder %v702, 1
      %vm705 = vcmp.eq.s32.totalorder %v703, 1
      %v706 = vsel %vm704, %v699, 0.0
      %v707 = vsel %vm705, %v698, 0.0
      %708 = vrot.lane.b32.xlu0 %v464, 32
      %v709 = vpop.permute.xlu0 %708
      %710 = vrot.lane.b32.xlu0 %v465, 32
      %v711 = vpop.permute.xlu0 %710
      %vm712 = vcmp.lt.s32.totalorder %v335, 32
      %v713 = vsel %vm712, %v709, %v711
      %v714 = vsel %vm712, %v711, %v709
      %v715 = vsel %vm681, 1, 0
      %v716 = vsel %vm682, 1, 0
      %vm717 = vcmp.eq.s32.totalorder %v715, 1
      %vm718 = vcmp.eq.s32.totalorder %v716, 1
      %v719 = vsel %vm717, %v714, 0.0
      %v720 = vsel %vm718, %v713, 0.0
      %721 = vrot.lane.b32.xlu0 %v464, 31
      %v722 = vpop.permute.xlu0 %721
      %723 = vrot.lane.b32.xlu0 %v465, 31
      %v724 = vpop.permute.xlu0 %723
      %vm725 = vcmp.lt.s32.totalorder %v335, 31
      %v726 = vsel %vm725, %v722, %v724
      %v727 = vsel %vm725, %v724, %v722
      %vm728 = vmand %vm681, %vm507
      %vm729 = vmand %vm682, %vm508
      %v730 = vsel %vm728, 1, 0
      %v731 = vsel %vm729, 1, 0
      %vm732 = vcmp.eq.s32.totalorder %v730, 1
      %vm733 = vcmp.eq.s32.totalorder %v731, 1
      %v734 = vsel %vm732, %v727, 0.0
      %v735 = vsel %vm733, %v726, 0.0
      %736 = vrot.lane.b32.xlu0 %v464, 30
      %v737 = vpop.permute.xlu0 %736
      %738 = vrot.lane.b32.xlu0 %v465, 30
      %v739 = vpop.permute.xlu0 %738
      %vm740 = vcmp.lt.s32.totalorder %v335, 30
      %v741 = vsel %vm740, %v737, %v739
      %v742 = vsel %vm740, %v739, %v737
      %vm743 = vcmp.lt.s32.totalorder %v337, 14
      %vm744 = vcmp.lt.s32.totalorder %v338, 14
      %vm745 = vmand %vm681, %vm743
      %vm746 = vmand %vm682, %vm744
      %v747 = vsel %vm745, 1, 0
      %v748 = vsel %vm746, 1, 0
      %vm749 = vcmp.eq.s32.totalorder %v747, 1
      %vm750 = vcmp.eq.s32.totalorder %v748, 1
      %v751 = vsel %vm749, %v742, 0.0
      %v752 = vsel %vm750, %v741, 0.0
      %753 = vrot.lane.b32.xlu0 %v464, 18
      %v754 = vpop.permute.xlu0 %753
      %755 = vrot.lane.b32.xlu0 %v465, 18
      %v756 = vpop.permute.xlu0 %755
      %vm757 = vcmp.lt.s32.totalorder %v335, 18
      %v758 = vsel %vm757, %v754, %v756
      %v759 = vsel %vm757, %v756, %v754
      %vm760 = vmand %vm475, %vm683
      %vm761 = vmand %vm476, %vm684
      %v762 = vsel %vm760, 1, 0
      %v763 = vsel %vm761, 1, 0
      %vm764 = vcmp.eq.s32.totalorder %v762, 1
      %vm765 = vcmp.eq.s32.totalorder %v763, 1
      %v766 = vsel %vm764, %v759, 0.0
      %v767 = vsel %vm765, %v758, 0.0
      %768 = vrot.lane.b32.xlu0 %v464, 17
      %v769 = vpop.permute.xlu0 %768
      %770 = vrot.lane.b32.xlu0 %v465, 17
      %v771 = vpop.permute.xlu0 %770
      %v772 = vsel %vm472, %v769, %v771
      %v773 = vsel %vm472, %v771, %v769
      %v774 = vsel %vm483, %v773, 0.0
      %v775 = vsel %vm484, %v772, 0.0
      %776 = vrot.lane.b32.xlu0 %v464, 16
      %v777 = vpop.permute.xlu0 %776
      %778 = vrot.lane.b32.xlu0 %v465, 16
      %v779 = vpop.permute.xlu0 %778
      %v780 = vsel %vm491, %v777, %v779
      %v781 = vsel %vm491, %v779, %v777
      %v782 = vsel %vm496, %v781, 0.0
      %v783 = vsel %vm497, %v780, 0.0
      %784 = vrot.lane.b32.xlu0 %v464, 15
      %v785 = vpop.permute.xlu0 %784
      %786 = vrot.lane.b32.xlu0 %v465, 15
      %v787 = vpop.permute.xlu0 %786
      %v788 = vsel %vm504, %v785, %v787
      %v789 = vsel %vm504, %v787, %v785
      %v790 = vsel %vm513, %v789, 0.0
      %v791 = vsel %vm514, %v788, 0.0
      %792 = vrot.lane.b32.xlu0 %v464, 14
      %v793 = vpop.permute.xlu0 %792
      %794 = vrot.lane.b32.xlu0 %v465, 14
      %v795 = vpop.permute.xlu0 %794
      %vm796 = vcmp.lt.s32.totalorder %v335, 14
      %v797 = vsel %vm796, %v793, %v795
      %v798 = vsel %vm796, %v795, %v793
      %vm799 = vmand %vm475, %vm743
      %vm800 = vmand %vm476, %vm744
      %v801 = vsel %vm799, 1, 0
      %v802 = vsel %vm800, 1, 0
      %vm803 = vcmp.eq.s32.totalorder %v801, 1
      %vm804 = vcmp.eq.s32.totalorder %v802, 1
      %v805 = vsel %vm803, %v798, 0.0
      %v806 = vsel %vm804, %v797, 0.0
      %807 = vrot.lane.b32.xlu0 %v464, 2
      %v808 = vpop.permute.xlu0 %807
      %809 = vrot.lane.b32.xlu0 %v465, 2
      %v810 = vpop.permute.xlu0 %809
      %vm811 = vcmp.lt.s32.totalorder %v335, 2
      %v812 = vsel %vm811, %v808, %v810
      %v813 = vsel %vm811, %v810, %v808
      %v814 = vsel %vm683, 1, 0
      %v815 = vsel %vm684, 1, 0
      %vm816 = vcmp.eq.s32.totalorder %v814, 1
      %vm817 = vcmp.eq.s32.totalorder %v815, 1
      %v818 = vsel %vm816, %v813, 0.0
      %v819 = vsel %vm817, %v812, 0.0
      %820 = vrot.lane.b32.xlu0 %v464, 1
      %v821 = vpop.permute.xlu0 %820
      %822 = vrot.lane.b32.xlu0 %v465, 1
      %v823 = vpop.permute.xlu0 %822
      %v824 = vsel %vm521, %v821, %v823
      %v825 = vsel %vm521, %v823, %v821
      %v826 = vsel %vm526, %v825, 0.0
      %v827 = vsel %vm527, %v824, 0.0
      %828 = vrot.lane.b32.xlu0 %v464, 127
      %v829 = vpop.permute.xlu0 %828
      %830 = vrot.lane.b32.xlu0 %v465, 127
      %v831 = vpop.permute.xlu0 %830
      %v832 = vsel %vm534, %v829, %v831
      %v833 = vsel %vm534, %v831, %v829
      %v834 = vsel %vm539, %v832, 0.0
      %v835 = vsel %vm540, %v833, 0.0
      %836 = vrot.lane.b32.xlu0 %v464, 126
      %v837 = vpop.permute.xlu0 %836
      %838 = vrot.lane.b32.xlu0 %v465, 126
      %v839 = vpop.permute.xlu0 %838
      %vm840 = vcmp.lt.s32.totalorder %v335, 126
      %v841 = vsel %vm840, %v837, %v839
      %v842 = vsel %vm840, %v839, %v837
      %v843 = vsel %vm743, 1, 0
      %v844 = vsel %vm744, 1, 0
      %vm845 = vcmp.eq.s32.totalorder %v843, 1
      %vm846 = vcmp.eq.s32.totalorder %v844, 1
      %v847 = vsel %vm845, %v841, 0.0
      %v848 = vsel %vm846, %v842, 0.0
      %849 = vrot.lane.b32.xlu0 %v464, 114
      %v850 = vpop.permute.xlu0 %849
      %851 = vrot.lane.b32.xlu0 %v465, 114
      %v852 = vpop.permute.xlu0 %851
      %vm853 = vcmp.lt.s32.totalorder %v335, 114
      %v854 = vsel %vm853, %v850, %v852
      %v855 = vsel %vm853, %v852, %v850
      %vm856 = vmand %vm550, %vm683
      %vm857 = vmand %vm551, %vm684
      %v858 = vsel %vm856, 1, 0
      %v859 = vsel %vm857, 1, 0
      %vm860 = vcmp.eq.s32.totalorder %v858, 1
      %vm861 = vcmp.eq.s32.totalorder %v859, 1
      %v862 = vsel %vm860, %v854, 0.0
      %v863 = vsel %vm861, %v855, 0.0
      %864 = vrot.lane.b32.xlu0 %v464, 113
      %v865 = vpop.permute.xlu0 %864
      %866 = vrot.lane.b32.xlu0 %v465, 113
      %v867 = vpop.permute.xlu0 %866
      %v868 = vsel %vm547, %v865, %v867
      %v869 = vsel %vm547, %v867, %v865
      %v870 = vsel %vm556, %v868, 0.0
      %v871 = vsel %vm557, %v869, 0.0
      %872 = vrot.lane.b32.xlu0 %v464, 112
      %v873 = vpop.permute.xlu0 %872
      %874 = vrot.lane.b32.xlu0 %v465, 112
      %v875 = vpop.permute.xlu0 %874
      %v876 = vsel %vm564, %v873, %v875
      %v877 = vsel %vm564, %v875, %v873
      %v878 = vsel %vm569, %v876, 0.0
      %v879 = vsel %vm570, %v877, 0.0
      %880 = vrot.lane.b32.xlu0 %v464, 111
      %v881 = vpop.permute.xlu0 %880
      %882 = vrot.lane.b32.xlu0 %v465, 111
      %v883 = vpop.permute.xlu0 %882
      %v884 = vsel %vm577, %v881, %v883
      %v885 = vsel %vm577, %v883, %v881
      %v886 = vsel %vm584, %v884, 0.0
      %v887 = vsel %vm585, %v885, 0.0
      %888 = vrot.lane.b32.xlu0 %v464, 110
      %v889 = vpop.permute.xlu0 %888
      %890 = vrot.lane.b32.xlu0 %v465, 110
      %v891 = vpop.permute.xlu0 %890
      %vm892 = vcmp.lt.s32.totalorder %v335, 110
      %v893 = vsel %vm892, %v889, %v891
      %v894 = vsel %vm892, %v891, %v889
      %vm895 = vmand %vm550, %vm743
      %vm896 = vmand %vm551, %vm744
      %v897 = vsel %vm895, 1, 0
      %v898 = vsel %vm896, 1, 0
      %vm899 = vcmp.eq.s32.totalorder %v897, 1
      %vm900 = vcmp.eq.s32.totalorder %v898, 1
      %v901 = vsel %vm899, %v893, 0.0
      %v902 = vsel %vm900, %v894, 0.0
      %903 = vrot.lane.b32.xlu0 %v464, 98
      %v904 = vpop.permute.xlu0 %903
      %905 = vrot.lane.b32.xlu0 %v465, 98
      %v906 = vpop.permute.xlu0 %905
      %vm907 = vcmp.lt.s32.totalorder %v335, 98
      %v908 = vsel %vm907, %v904, %v906
      %v909 = vsel %vm907, %v906, %v904
      %vm910 = vcmp.lt.s32.totalorder %v335, 224
      %vm911 = vcmp.lt.s32.totalorder %v336, 224
      %vm912 = vmand %vm910, %vm683
      %vm913 = vmand %vm911, %vm684
      %v914 = vsel %vm912, 1, 0
      %v915 = vsel %vm913, 1, 0
      %vm916 = vcmp.eq.s32.totalorder %v914, 1
      %vm917 = vcmp.eq.s32.totalorder %v915, 1
      %v918 = vsel %vm916, %v908, 0.0
      %v919 = vsel %vm917, %v909, 0.0
      %920 = vrot.lane.b32.xlu0 %v464, 97
      %v921 = vpop.permute.xlu0 %920
      %922 = vrot.lane.b32.xlu0 %v465, 97
      %v923 = vpop.permute.xlu0 %922
      %vm924 = vcmp.lt.s32.totalorder %v335, 97
      %v925 = vsel %vm924, %v921, %v923
      %v926 = vsel %vm924, %v923, %v921
      %vm927 = vmand %vm910, %vm477
      %vm928 = vmand %vm911, %vm478
      %v929 = vsel %vm927, 1, 0
      %v930 = vsel %vm928, 1, 0
      %vm931 = vcmp.eq.s32.totalorder %v929, 1
      %vm932 = vcmp.eq.s32.totalorder %v930, 1
      %v933 = vsel %vm931, %v925, 0.0
      %v934 = vsel %vm932, %v926, 0.0
      %935 = vrot.lane.b32.xlu0 %v464, 96
      %v936 = vpop.permute.xlu0 %935
      %937 = vrot.lane.b32.xlu0 %v465, 96
      %v938 = vpop.permute.xlu0 %937
      %vm939 = vcmp.lt.s32.totalorder %v335, 96
      %v940 = vsel %vm939, %v936, %v938
      %v941 = vsel %vm939, %v938, %v936
      %v942 = vsel %vm910, 1, 0
      %v943 = vsel %vm911, 1, 0
      %vm944 = vcmp.eq.s32.totalorder %v942, 1
      %vm945 = vcmp.eq.s32.totalorder %v943, 1
      %v946 = vsel %vm944, %v940, 0.0
      %v947 = vsel %vm945, %v941, 0.0
      %948 = vrot.lane.b32.xlu0 %v464, 95
      %v949 = vpop.permute.xlu0 %948
      %950 = vrot.lane.b32.xlu0 %v465, 95
      %v951 = vpop.permute.xlu0 %950
      %vm952 = vcmp.lt.s32.totalorder %v335, 95
      %v953 = vsel %vm952, %v949, %v951
      %v954 = vsel %vm952, %v951, %v949
      %vm955 = vmand %vm910, %vm507
      %vm956 = vmand %vm911, %vm508
      %v957 = vsel %vm955, 1, 0
      %v958 = vsel %vm956, 1, 0
      %vm959 = vcmp.eq.s32.totalorder %v957, 1
      %vm960 = vcmp.eq.s32.totalorder %v958, 1
      %v961 = vsel %vm959, %v953, 0.0
      %v962 = vsel %vm960, %v954, 0.0
      %963 = vrot.lane.b32.xlu0 %v464, 94
      %v964 = vpop.permute.xlu0 %963
      %965 = vrot.lane.b32.xlu0 %v465, 94
      %v966 = vpop.permute.xlu0 %965
      %vm967 = vcmp.lt.s32.totalorder %v335, 94
      %v968 = vsel %vm967, %v964, %v966
      %v969 = vsel %vm967, %v966, %v964
      %vm970 = vmand %vm910, %vm743
      %vm971 = vmand %vm911, %vm744
      %v972 = vsel %vm970, 1, 0
      %v973 = vsel %vm971, 1, 0
      %vm974 = vcmp.eq.s32.totalorder %v972, 1
      %vm975 = vcmp.eq.s32.totalorder %v973, 1
      %v976 = vsel %vm974, %v968, 0.0
      %v977 = vsel %vm975, %v969, 0.0
      %v978 = vld [vmem:[%s5] sm:$0xff]
      %v979 = vld [vmem:[%s5 + $0x8] sm:$0xff]
      %v980 = vld [vmem:[%s6] sm:$0xff]
      %982 = vset.pattern.permute.xlu0 0
      %983 = vperm.xlu0 %982, %v980
      %v984 = vpop.permute.xlu0 %983
      %v987 = vsel %vm595, %v979, 0
      %989 = vmatprep.subr.mxu0 %v863
      %990 = vmatpush1.msra.mxu0 %v862
      %991 = vmatprep.subr.mxu0 %v848
      %992 = vmatpush1.msra.mxu0 %v847
      %993 = vmatprep.subr.mxu0 %v835
      %994 = vmatpush1.msra.mxu0 %v834
      %995 = vmatprep.subr.mxu0 %v465
      %996 = vmatpush1.msra.mxu0 %v464
      %997 = vmatprep.subr.mxu0 %v827
      %998 = vmatpush1.msra.mxu0 %v826
      %999 = vmatprep.subr.mxu0 %v819
      %1000 = vmatpush1.msra.mxu0 %v818
      %1001 = vmatprep.subr.mxu0 %v806
      %1002 = vmatpush1.msra.mxu0 %v805
      %1003 = vmatprep.subr.mxu0 %v791
      %1004 = vmatpush1.msra.mxu0 %v790
      %1005 = vmatprep.subr.mxu0 %v783
      %1006 = vmatpush1.msra.mxu0 %v782
      %1007 = vmatprep.subr.mxu0 %v775
      %1008 = vmatpush1.msra.mxu0 %v774
      %1009 = vmatprep.subr.mxu0 %v767
      %1010 = vmatpush1.msra.mxu0 %v766
      %1011 = vmatprep.subr.mxu0 %v752
      %1012 = vmatpush1.msra.mxu0 %v751
      %1013 = vmatprep.subr.mxu0 %v735
      %1014 = vmatpush1.msra.mxu0 %v734
      %1015 = vmatprep.subr.mxu0 %v720
      %1016 = vmatpush1.msra.mxu0 %v719
      %1017 = vmatprep.subr.mxu0 %v707
      %1018 = vmatpush1.msra.mxu0 %v706
      %1019 = vmatprep.subr.mxu0 %v692
      %1020 = vmatpush1.msra.mxu0 %v691
      %1021 = vmatprep.subr.mxu0 0.0
      %1022 = vmatpush2.msra.mxu0 0.0
      %1023 = vmatprep.subr.mxu0 0.0
      %1024 = vmatpush2.msra.mxu0 0.0
      %1025 = vmatprep.subr.mxu0 0.0
      %1026 = vmatpush2.msra.mxu0 0.0
      %1027 = vmatprep.subr.mxu0 0.0
      %1028 = vmatpush2.msra.mxu0 0.0
      %1029 = vmatprep.subr.mxu0 0.0
      %1030 = vmatpush2.msra.mxu0 0.0
      %1031 = vmatprep.subr.mxu0 0.0
      %1032 = vmatpush2.msra.mxu0 0.0
      %1033 = vmatprep.subr.mxu0 0.0
      %1034 = vmatpush2.msra.mxu0 0.0
      %1035 = vmatprep.subr.mxu0 %v977
      %1036 = vmatpush2.msra.mxu0 %v976
      %1037 = vmatprep.subr.mxu0 %v962
      %1038 = vmatpush2.msra.mxu0 %v961
      %1039 = vmatprep.subr.mxu0 %v947
      %1040 = vmatpush2.msra.mxu0 %v946
      %1041 = vmatprep.subr.mxu0 %v934
      %1042 = vmatpush2.msra.mxu0 %v933
      %1043 = vmatprep.subr.mxu0 %v919
      %1044 = vmatpush2.msra.mxu0 %v918
      %1045 = vmatprep.subr.mxu0 %v902
      %1046 = vmatpush2.msra.mxu0 %v901
      %1047 = vmatprep.subr.mxu0 %v887
      %1048 = vmatpush2.msra.mxu0 %v886
      %1049 = vmatprep.subr.mxu0 %v879
      %1050 = vmatpush2.msra.mxu0 %v878
      %1051 = vmatprep.subr.mxu0 %v871
      %1052 = vmatpush2.msra.mxu0 %v870
      %1053 = vmatprep.mubr.f32.mxu0 %v987
      %1054 = vmatmul.mubr.f32.gmra.mxu0 %v978
      %v1055 = vpop.f32.mrf.mxu0
      %v1056 = vadd.f32 %v984, %v1055
      %v1057 = vpop.f32.mrf.mxu0
      %v1058 = vadd.f32 %v984, %v1057
      %1059 = vdwg.mxu0
      %v1060 = vmax.f32 %v1056, 0.0
      %v1061 = vmax.f32 %v1058, 0.0
      %1062 = vst [vmem:[%s332 + $0x20] sm:$0xff] %v1060
      %1063 = vst [vmem:[%s332 + $0x28] sm:$0xff] %v1061
      %1065 = vrot.lane.b32.xlu0 %v333, 17
      %v1066 = vpop.permute.xlu0 %1065
      %1067 = vrot.lane.b32.xlu0 %v361, 17
      %v1068 = vpop.permute.xlu0 %1067
      %v1069 = vsel %vm472, %v1066, %v1068
      %v1070 = vsel %vm472, %v1068, %v1066
      %v1071 = vsel %vm483, %v1070, -3.4028235e+38
      %v1072 = vsel %vm484, %v1069, -3.4028235e+38
      %v1075 = vcombine.low %v1071, %v1072
      %v1077 = vmax.f32 %v333, %v1075
      %1078 = vrot.lane.b32.xlu0 %v333, 16
      %v1079 = vpop.permute.xlu0 %1078
      %1080 = vrot.lane.b32.xlu0 %v361, 16
      %v1081 = vpop.permute.xlu0 %1080
      %v1082 = vsel %vm491, %v1079, %v1081
      %v1083 = vsel %vm491, %v1081, %v1079
      %v1084 = vsel %vm496, %v1083, -3.4028235e+38
      %v1085 = vsel %vm497, %v1082, -3.4028235e+38
      %v1088 = vcombine.low %v1084, %v1085
      %v1090 = vmax.f32 %v1077, %v1088
      %1091 = vrot.lane.b32.xlu0 %v333, 15
      %v1092 = vpop.permute.xlu0 %1091
      %1093 = vrot.lane.b32.xlu0 %v361, 15
      %v1094 = vpop.permute.xlu0 %1093
      %v1095 = vsel %vm504, %v1092, %v1094
      %v1096 = vsel %vm504, %v1094, %v1092
      %v1097 = vsel %vm513, %v1096, -3.4028235e+38
      %v1098 = vsel %vm514, %v1095, -3.4028235e+38
      %v1101 = vcombine.low %v1097, %v1098
      %v1103 = vmax.f32 %v1090, %v1101
      %1104 = vrot.lane.b32.xlu0 %v333, 1
      %v1105 = vpop.permute.xlu0 %1104
      %1106 = vrot.lane.b32.xlu0 %v361, 1
      %v1107 = vpop.permute.xlu0 %1106
      %v1108 = vsel %vm521, %v1105, %v1107
      %v1109 = vsel %vm521, %v1107, %v1105
      %v1110 = vsel %vm526, %v1109, -3.4028235e+38
      %v1111 = vsel %vm527, %v1108, -3.4028235e+38
      %v1114 = vcombine.low %v1110, %v1111
      %v1116 = vmax.f32 %v1103, %v1114
      %1117 = vrot.lane.b32.xlu0 %v333, 127
      %v1118 = vpop.permute.xlu0 %1117
      %1119 = vrot.lane.b32.xlu0 %v361, 127
      %v1120 = vpop.permute.xlu0 %1119
      %v1121 = vsel %vm534, %v1118, %v1120
      %v1122 = vsel %vm534, %v1120, %v1118
      %v1123 = vsel %vm539, %v1121, -3.4028235e+38
      %v1124 = vsel %vm540, %v1122, -3.4028235e+38
      %v1127 = vcombine.low %v1123, %v1124
      %v1129 = vmax.f32 %v1116, %v1127
      %1130 = vrot.lane.b32.xlu0 %v333, 113
      %v1131 = vpop.permute.xlu0 %1130
      %1132 = vrot.lane.b32.xlu0 %v361, 113
      %v1133 = vpop.permute.xlu0 %1132
      %v1134 = vsel %vm547, %v1131, %v1133
      %v1135 = vsel %vm547, %v1133, %v1131
      %v1136 = vsel %vm556, %v1134, -3.4028235e+38
      %v1137 = vsel %vm557, %v1135, -3.4028235e+38
      %v1140 = vcombine.low %v1136, %v1137
      %v1142 = vmax.f32 %v1129, %v1140
      %1143 = vrot.lane.b32.xlu0 %v333, 112
      %v1144 = vpop.permute.xlu0 %1143
      %1145 = vrot.lane.b32.xlu0 %v361, 112
      %v1146 = vpop.permute.xlu0 %1145
      %v1147 = vsel %vm564, %v1144, %v1146
      %v1148 = vsel %vm564, %v1146, %v1144
      %v1149 = vsel %vm569, %v1147, -3.4028235e+38
      %v1150 = vsel %vm570, %v1148, -3.4028235e+38
      %v1153 = vcombine.low %v1149, %v1150
      %v1155 = vmax.f32 %v1142, %v1153
      %1156 = vrot.lane.b32.xlu0 %v333, 111
      %v1157 = vpop.permute.xlu0 %1156
      %1158 = vrot.lane.b32.xlu0 %v361, 111
      %v1159 = vpop.permute.xlu0 %1158
      %v1160 = vsel %vm577, %v1157, %v1159
      %v1161 = vsel %vm577, %v1159, %v1157
      %v1162 = vsel %vm584, %v1160, -3.4028235e+38
      %v1163 = vsel %vm585, %v1161, -3.4028235e+38
      %v1166 = vcombine.low %v1162, %v1163
      %v1168 = vmax.f32 %v1155, %v1166
      %v1169 = vld [vmem:[%s7] sm:$0xff]
      %v1170 = vld [vmem:[%s8] sm:$0xff]
      %1172 = vset.pattern.permute.xlu0 0
      %1173 = vperm.xlu0 %1172, %v1170
      %v1174 = vpop.permute.xlu0 %1173
      %v1177 = vcombine.high %v1168, %v1168
      %v1179 = vsel %vm362, %v1169, 0
      %v1181 = vsel %vm372, %v1168, 0
      %v1183 = vsel %vm372, %v1177, 0
      %1185 = vmatprep.subr.mxu0 0.0
      %1186 = vmatpush1.msra.mxu0 0.0
      %1187 = vmatprep.subr.mxu0 0.0
      %1188 = vmatpush1.msra.mxu0 0.0
      %1189 = vmatprep.subr.mxu0 0.0
      %1190 = vmatpush1.msra.mxu0 0.0
      %1191 = vmatprep.subr.mxu0 0.0
      %1192 = vmatpush1.msra.mxu0 0.0
      %1193 = vmatprep.subr.mxu0 0.0
      %1194 = vmatpush1.msra.mxu0 0.0
      %1195 = vmatprep.subr.mxu0 0.0
      %1196 = vmatpush1.msra.mxu0 0.0
      %1197 = vmatprep.subr.mxu0 0.0
      %1198 = vmatpush1.msra.mxu0 0.0
      %1199 = vmatprep.subr.mxu0 0.0
      %1200 = vmatpush1.msra.mxu0 0.0
      %1201 = vmatprep.subr.mxu0 0.0
      %1202 = vmatpush1.msra.mxu0 0.0
      %1203 = vmatprep.subr.mxu0 0.0
      %1204 = vmatpush1.msra.mxu0 0.0
      %1205 = vmatprep.subr.mxu0 0.0
      %1206 = vmatpush1.msra.mxu0 0.0
      %1207 = vmatprep.subr.mxu0 0.0
      %1208 = vmatpush1.msra.mxu0 0.0
      %1209 = vmatprep.subr.mxu0 0.0
      %1210 = vmatpush1.msra.mxu0 0.0
      %1211 = vmatprep.subr.mxu0 0.0
      %1212 = vmatpush1.msra.mxu0 0.0
      %1213 = vmatprep.subr.mxu0 0.0
      %1214 = vmatpush1.msra.mxu0 0.0
      %1215 = vmatprep.subr.mxu0 %v1183
      %1216 = vmatpush1.msra.mxu0 %v1181
      %1217 = vmatprep.subr.mxu0 0.0
      %1218 = vmatpush2.msra.mxu0 0.0
      %1219 = vmatprep.subr.mxu0 0.0
      %1220 = vmatpush2.msra.mxu0 0.0
      %1221 = vmatprep.subr.mxu0 0.0
      %1222 = vmatpush2.msra.mxu0 0.0
      %1223 = vmatprep.subr.mxu0 0.0
      %1224 = vmatpush2.msra.mxu0 0.0
      %1225 = vmatprep.subr.mxu0 0.0
      %1226 = vmatpush2.msra.mxu0 0.0
      %1227 = vmatprep.subr.mxu0 0.0
      %1228 = vmatpush2.msra.mxu0 0.0
      %1229 = vmatprep.subr.mxu0 0.0
      %1230 = vmatpush2.msra.mxu0 0.0
      %1231 = vmatprep.subr.mxu0 0.0
      %1232 = vmatpush2.msra.mxu0 0.0
      %1233 = vmatprep.subr.mxu0 0.0
      %1234 = vmatpush2.msra.mxu0 0.0
      %1235 = vmatprep.subr.mxu0 0.0
      %1236 = vmatpush2.msra.mxu0 0.0
      %1237 = vmatprep.subr.mxu0 0.0
      %1238 = vmatpush2.msra.mxu0 0.0
      %1239 = vmatprep.subr.mxu0 0.0
      %1240 = vmatpush2.msra.mxu0 0.0
      %1241 = vmatprep.subr.mxu0 0.0
      %1242 = vmatpush2.msra.mxu0 0.0
      %1243 = vmatprep.subr.mxu0 0.0
      %1244 = vmatpush2.msra.mxu0 0.0
      %1245 = vmatprep.subr.mxu0 0.0
      %1246 = vmatpush2.msra.mxu0 0.0
      %1247 = vmatprep.subr.mxu0 0.0
      %1248 = vmatpush2.msra.mxu0 0.0
      %1249 = vmatprep.mubr.f32.mxu0 0.0
      %1250 = vmatmul.mubr.f32.gmra.mxu0 %v1179
      %v1251 = vpop.f32.mrf.mxu0
      %v1252 = vadd.f32 %v1174, %v1251
      %v1253 = vpop.f32.mrf.mxu0
      %v1254 = vadd.f32 %v1174, %v1253
      %1255 = vdwg.mxu0
      %v1256 = vmax.f32 %v1252, 0.0
      %v1257 = vmax.f32 %v1254, 0.0
      %1258 = vst [vmem:[%s332 + $0x30] sm:$0xff] %v1256
      %1259 = vst [vmem:[%s332 + $0x38] sm:$0xff] %v1257
      %p1260 = scmp.lt.s32.totalorder %s20, 1
      %s1261 = scalar_select %p1260, %s20, 1
      %s1262 = smul.addr %s1261, 8
      %s1263 = smul.addr %s1262, 8
      %s1264 = scalar_lea.vmem %s9, %s1263
      // Predicated region
      $region57: #{inception_forward.1} parent=55 // pred_check
        %p1265 = pneg %p232
      $region58: #{inception_forward.1} parent=55 // pred_check_branch
        %1267 = sbr.rel (%p1265) target = $region60
      $region59: #{inception_forward.1} parent=55 // pred_region
        _
      $region60: #{inception_forward.1} parent=55 // pred_fallthru
        _
    $region56: #{inception_forward.1} parent=5 // pred_fallthru
      _
    %p1268 = scmp.le.s32.totalorder 2, %s15
    // Predicated region
    $region61: #{inception_forward.1} parent=5 // pred_check
      %p1269 = pneg %p1268
    $region62: #{inception_forward.1} parent=5 // pred_check_branch
      %1271 = sbr.rel (%p1269) target = $region64
    $region63: #{inception_forward.1} parent=5 // pred_region
      %s1272 = ssub.s32 %s15, 2
      // Predicated region
      $region65: #{inception_forward.1} parent=63 // pred_check
        %p1273 = pneg %p238
      $region66: #{inception_forward.1} parent=63 // pred_check_branch
        %1275 = sbr.rel (%p1273) target = $region68
      $region67: #{inception_forward.1} parent=63 // pred_region
        %p1276 = scmp.lt.s32.totalorder %s21, 1
        %s1277 = scalar_select %p1276, %s21, 1
        %s1278 = smul.addr %s1277, 8
        %s1279 = smul.addr %s1278, 8
        %s1280 = scalar_lea.vmem %s9, %s1279
      $region68: #{inception_forward.1} parent=63 // pred_fallthru
        _
    $region64: #{inception_forward.1} parent=5 // pred_fallthru
      _
  $region6: #{inception_forward.1} parent=0 // loop_footer
    %s19 = sadd.s32 1, %s15
  $region7: #{inception_forward.1} parent=0 // loop_footer_branch
    %14 = sbr.rel target = $region3
  $region8: #{inception_forward.1} parent=0 // loop_exit
    _

</llo_original>
